<compile_context>
chip_gen: v7x
topology: tpu7x:2x2x1
jax: 0.10.0
libtpu: 0.0.40
codegen_flags: <defaults>
</compile_context>

<pallas_src>
import functools

import jax
import jax.numpy as jnp
from jax.experimental import pallas as pl
from jax.experimental.pallas import tpu as pltpu

TAU = 2.0
V_TH = 1.0
INV_TAU = 1.0 / TAU  # 0.5, exact


def _batch_block(b):
    # Largest block size such that the parallel grid axis still has extent >= 2
    # (keeps both v7x TensorCores busy); falls back to 1 block for B == 1.
    for bb in range(b // 2, 0, -1):
        if b % bb == 0:
            return bb
    return 1


# ---------------------------------------------------------------------------
# Fused kernel: LIF1 -> pwconv1+BN1 -> LIF2 -> dwconv7x7 -> pwconv2+BN2
# grid = (B/bb, T); T is the inner sequential axis, membranes persist in VMEM.
# ---------------------------------------------------------------------------
def _sepconv_kernel(x_ref, w1_ref, sh1_ref, wm_ref, w2_ref, sh2_ref, o_ref,
                    v1_ref, v2_ref, *, H, W, K):
    # x_ref:   (1, bb, C, HW)     input activation block for time step t (lane-dense HW)
    # w1_ref:  (Cmed, C)          BN1-scale-folded pwconv1 weights
    # sh1_ref: (Cmed, 1)          BN1 shift
    # wm_ref:  (K*K, Cmed, HW)    depthwise tap weights pre-fused with boundary masks
    # w2_ref:  (Cout, Cmed)       BN2-scale-folded pwconv2 weights
    # sh2_ref: (Cout, 1)          BN2 shift
    # o_ref:   (1, bb, Cout, HW)  output block
    # v1_ref:  (bb, C, HW)        LIF1 membrane (persists across t)
    # v2_ref:  (bb, Cmed, HW)     LIF2 membrane (persists across t)
    t = pl.program_id(1)

    @pl.when(t == 0)
    def _():
        v1_ref[...] = jnp.zeros_like(v1_ref)
        v2_ref[...] = jnp.zeros_like(v2_ref)

    bb, C, HW = v1_ref.shape
    Cmed = v2_ref.shape[1]
    p = (K - 1) // 2

    # ---- LIF1: charge / fire / hard reset — vectorized over the whole block --
    x = x_ref[0].astype(jnp.float32)                  # (bb, C, HW)
    v1 = v1_ref[...]
    v1 = v1 + (x - v1) * INV_TAU
    s1 = (v1 >= V_TH).astype(jnp.float32)
    v1_ref[...] = v1 * (1.0 - s1)

    # Loop-invariant parameter reads hoisted out of the per-j loop.
    w1 = w1_ref[...]                                  # (Cmed, C)
    sh1 = sh1_ref[...]                                # (Cmed, 1)
    w2 = w2_ref[...]                                  # (Cout, Cmed)
    sh2 = sh2_ref[...]                                # (Cout, 1)

    for j in range(bb):                               # static unroll over the batch block
        # ---- pwconv1 + BN1 (scale folded): MXU matmul, HW stays in the lane axis
        y1 = jnp.dot(w1, s1[j], preferred_element_type=jnp.float32) + sh1   # (Cmed, HW)

        # ---- LIF2 -----------------------------------------------------------
        v2 = v2_ref[j]
        v2 = v2 + (y1 - v2) * INV_TAU
        s2 = (v2 >= V_TH).astype(jnp.float32)         # (Cmed, HW), spikes are exactly 0/1
        v2_ref[j] = v2 * (1.0 - s2)

        # ---- depthwise 7x7: K*K XLU lane rotations of the flat (Cmed,HW) slab.
        # The circular wrap and out-of-image taps are zeroed by the boundary
        # masks pre-fused into wm_ref (exactly reproducing 2-D zero padding).
        acc = None
        for kh in range(K):
            for kw in range(K):
                tap = kh * K + kw
                d = (kh - p) * W + (kw - p)           # flat source offset of this tap
                src = s2 if d == 0 else pltpu.roll(s2, shift=(-d) % HW, axis=1)
                term = src * wm_ref[tap]              # (Cmed, HW)
                acc = term if acc is None else acc + term

        # ---- pwconv2 + BN2 (scale folded): MXU matmul --------------------------
        out = jnp.dot(w2, acc, preferred_element_type=jnp.float32) + sh2    # (Cout, HW)
        o_ref[0, j] = out.astype(o_ref.dtype)


# ---------------------------------------------------------------------------
# Parameter preparation (done once in the wrapper, not per kernel step)
# ---------------------------------------------------------------------------
def prepare_params(w1, wdw, w2, scale1, shift1, scale2, shift2, H, W):
    # w1: (Cmed, C) pwconv1 weight; wdw: (Cmed, K, K) dwconv weight; w2: (Cout, Cmed) pwconv2
    Cmed, _ = w1.shape
    K = wdw.shape[-1]
    p = (K - 1) // 2
    HW = H * W

    # Fold the BN scales into the 1x1 conv weights; shift stays as a per-channel add.
    w1s = w1 * scale1[:, None]                          # (Cmed, C)
    w2s = w2 * scale2[:, None]                          # (Cout, Cmed)
    sh1 = shift1[:, None]                               # (Cmed, 1)
    sh2 = shift2[:, None]                               # (Cout, 1)
    # TODO(synk): the BN shifts could be folded into the MXU dots by appending a ones row to the
    # activations; kept as a single broadcast-add per step for simplicity.

    # Per-tap depthwise weight pre-fused with the 2-D zero-padding boundary mask
    # (trace-time constants) for the flattened circular-roll formulation.
    pos = jnp.arange(HW, dtype=jnp.int32)
    hh, ww = pos // W, pos % W
    wm = []
    for kh in range(K):
        for kw in range(K):
            dh, dw = kh - p, kw - p
            ok = ((hh + dh >= 0) & (hh + dh < H) &
                  (ww + dw >= 0) & (ww + dw < W)).astype(jnp.float32)        # (HW,)
            wm.append(wdw[:, kh, kw][:, None] * ok[None, :])                 # (Cmed, HW)
    wm = jnp.stack(wm)                                                       # (K*K, Cmed, HW)

    return dict(w1s=w1s, sh1=sh1, w2s=w2s, sh2=sh2, wm=wm)


# ---------------------------------------------------------------------------
# SepConv forward: only free reshapes in the wrapper (no transposes, no pads).
# ---------------------------------------------------------------------------
def sepconv_forward(x, params):
    # x: (T, B, C, H, W) -- PyTorch layout
    T, B, C, H, W = x.shape
    HW = H * W
    x4 = x.reshape(T, B, C, HW)                         # free reshape

    w1s, sh1 = params["w1s"], params["sh1"]
    w2s, sh2 = params["w2s"], params["sh2"]
    wm = params["wm"]
    Cmed = w1s.shape[0]
    Cout = w2s.shape[0]
    KK = wm.shape[0]
    K = int(round(KK ** 0.5))
    bb = _batch_block(B)

    kern = functools.partial(_sepconv_kernel, H=H, W=W, K=K)
    y = pl.pallas_call(
        kern,
        out_shape=jax.ShapeDtypeStruct((T, B, Cout, HW), x.dtype),
        grid_spec=pltpu.PrefetchScalarGridSpec(
            num_scalar_prefetch=0,
            grid=(B // bb, T),
            in_specs=[
                pl.BlockSpec((1, bb, C, HW), lambda i, t: (t, i, 0, 0)),
                pl.BlockSpec((Cmed, C), lambda i, t: (0, 0)),
                pl.BlockSpec((Cmed, 1), lambda i, t: (0, 0)),
                pl.BlockSpec((KK, Cmed, HW), lambda i, t: (0, 0, 0)),
                pl.BlockSpec((Cout, Cmed), lambda i, t: (0, 0)),
                pl.BlockSpec((Cout, 1), lambda i, t: (0, 0)),
            ],
            out_specs=pl.BlockSpec((1, bb, Cout, HW), lambda i, t: (t, i, 0, 0)),
            scratch_shapes=[
                pltpu.VMEM((bb, C, HW), jnp.float32),     # LIF1 membrane
                pltpu.VMEM((bb, Cmed, HW), jnp.float32),  # LIF2 membrane
            ],
        ),
        compiler_params=pltpu.CompilerParams(
            dimension_semantics=("parallel", "arbitrary")),   # never mark T "parallel"
    )(x4, w1s, sh1, wm, w2s, sh2)
    return y.reshape(T, B, Cout, H, W)


# ---------------------------------------------------------------------------
# Pure-JAX reference (same folded-BN algebra; mathematically identical to
# scale*(conv)+shift).  Used for the correctness check.
# ---------------------------------------------------------------------------
def sepconv_reference(x, w1, wdw, w2, scale1, shift1, scale2, shift2):
    T, B, C, H, W = x.shape
    Cmed, K = wdw.shape[0], wdw.shape[-1]
    p = (K - 1) // 2

    def lif(seq):
        def step(v, xt):
            v = v + (xt - v) * INV_TAU
            s = (v >= V_TH).astype(jnp.float32)
            return v * (1.0 - s), s
        _, out = jax.lax.scan(step, jnp.zeros_like(seq[0]), seq)
        return out

    def pw(w, a):  # w: (Cout, Cin); a: (..., Cin, H, W) -> (..., Cout, H, W)
        return jnp.sum(w[:, :, None, None] * a[..., None, :, :, :], axis=-3)

    s1 = lif(x)                                                           # (T,B,C,H,W)
    y1 = pw(w1 * scale1[:, None], s1) + shift1[None, None, :, None, None]
    s2 = lif(y1)                                                          # (T,B,Cmed,H,W)
    z = s2.reshape(T * B, Cmed, H, W)
    zp = jnp.pad(z, ((0, 0), (0, 0), (p, p), (p, p)))
    d = jnp.zeros_like(z)
    for kh in range(K):
        for kw in range(K):
            d = d + wdw[None, :, kh, kw, None, None] * zp[:, :, kh:kh + H, kw:kw + W]
    y2 = pw(w2 * scale2[:, None], d) + shift2[None, :, None, None]
    return y2.reshape(T, B, -1, H, W)


if __name__ == "__main__":
    key = jax.random.PRNGKey(0)
    T, B, dim, H, W = 4, 2, 8, 16, 16
    expansion_ratio = 2
    Cmed = dim * expansion_ratio
    K = 7

    ks = jax.random.split(key, 8)

    def q(a, s, lim):
        # Quantize to a dyadic grid (and clip the magnitude) so every pre-spike quantity is
        # exact in f32 AND both 1x1-conv operands are exactly representable in bf16; the
        # kernel's MXU dots then match the f32 reference bit-for-bit regardless of the MXU's
        # internal precision, so LIF thresholds cannot flip between kernel and reference.
        return jnp.clip(jnp.round(a * s), -lim, lim) / s

    x = q(jax.random.normal(ks[0], (T, B, dim, H, W), jnp.float32) * 1.5, 64, 250)

    # Parameters in PyTorch orientation (1x1 conv kernels squeezed):
    w1 = q(jax.random.normal(ks[1], (Cmed, dim), jnp.float32) * 0.3, 64, 121)    # pwconv1.weight
    wdw = q(jax.random.normal(ks[2], (Cmed, K, K), jnp.float32) * 0.15, 8, 3)    # dwconv.weight
    w2 = q(jax.random.normal(ks[3], (dim, Cmed), jnp.float32) * 0.3, 64, 121)    # pwconv2.weight

    # Folded BatchNorm (inference form): per-channel scale / shift.  Scales are exact powers
    # of two so folding them into the weights keeps the weights bf16-exact.
    pow2 = jnp.array([0.5, 1.0, 2.0], jnp.float32)
    scale1 = jnp.take(pow2, jax.random.randint(ks[4], (Cmed,), 0, 3))
    shift1 = q(jax.random.normal(ks[5], (Cmed,), jnp.float32) * 0.1, 256, 120)
    scale2 = jnp.take(pow2, jax.random.randint(ks[6], (dim,), 0, 3))
    shift2 = q(jax.random.normal(ks[7], (dim,), jnp.float32) * 0.1, 256, 120)

    params = prepare_params(w1, wdw, w2, scale1, shift1, scale2, shift2, H, W)

    out = jax.jit(sepconv_forward)(x, params)
    out = jax.block_until_ready(out)

    ref = sepconv_reference(x, w1, wdw, w2, scale1, shift1, scale2, shift2)
    assert out.shape == (T, B, dim, H, W)
    assert out.dtype == x.dtype
    max_err = float(jnp.max(jnp.abs(out - ref)))
    assert max_err < 1e-4, f"mismatch vs reference (max abs err {max_err})"
    print("KERNEL_OK")
</pallas_src>

<mosaic_0001>
module attributes {stable_mosaic.version = 11 : i64} {
  func.func @_sepconv_kernel(%arg0: i32, %arg1: i32, %arg2: memref<1x1x8x256xf32, #tpu.memory_space<vmem>>, %arg3: memref<16x8xf32, #tpu.memory_space<vmem>>, %arg4: memref<16x1xf32, #tpu.memory_space<vmem>>, %arg5: memref<49x16x256xf32, #tpu.memory_space<vmem>>, %arg6: memref<8x16xf32, #tpu.memory_space<vmem>>, %arg7: memref<8x1xf32, #tpu.memory_space<vmem>>, %arg8: memref<1x1x8x256xf32, #tpu.memory_space<vmem>>, %arg9: memref<1x8x256xf32, #tpu.memory_space<vmem>>, %arg10: memref<1x16x256xf32, #tpu.memory_space<vmem>>) attributes {dimension_semantics = [#tpu.dimension_semantics<parallel>, #tpu.dimension_semantics<arbitrary>], iteration_bounds = array<i64: 2, 4>, scalar_prefetch = 0 : i64, scratch_operands = 2 : i64, tpu.core_type = #tpu.core_type<tc>, window_params = [{transform_indices = @transform_0, window_bounds = array<i64: 1, 1, 8, 256>}, {pipeline_mode = #tpu.pipeline_mode<synchronous>, transform_indices = @transform_1, window_bounds = array<i64: 16, 8>}, {pipeline_mode = #tpu.pipeline_mode<synchronous>, transform_indices = @transform_2, window_bounds = array<i64: 16, 1>}, {pipeline_mode = #tpu.pipeline_mode<synchronous>, transform_indices = @transform_3, window_bounds = array<i64: 49, 16, 256>}, {pipeline_mode = #tpu.pipeline_mode<synchronous>, transform_indices = @transform_4, window_bounds = array<i64: 8, 16>}, {pipeline_mode = #tpu.pipeline_mode<synchronous>, transform_indices = @transform_5, window_bounds = array<i64: 8, 1>}, {transform_indices = @transform_6, window_bounds = array<i64: 1, 1, 8, 256>}]} {
    %c0_i32 = arith.constant 0 : i32
    %0 = arith.cmpi eq, %arg1, %c0_i32 : i32
    %1 = arith.extui %0 : i1 to i32
    %c0_i32_0 = arith.constant 0 : i32
    %2 = arith.cmpi ne, %1, %c0_i32_0 : i32
    scf.if %2 {
      %cst_134 = arith.constant 0.000000e+00 : f32
      %291 = vector.broadcast %cst_134 : f32 to vector<1x8x256xf32>
      %c0_135 = arith.constant 0 : index
      %c0_136 = arith.constant 0 : index
      %c0_137 = arith.constant 0 : index
      %292 = vector.load %arg9[%c0_135, %c0_136, %c0_137] : memref<1x8x256xf32, #tpu.memory_space<vmem>>, vector<1x8x256xf32>
      tpu.vector_store %arg9[%c0_135, %c0_136, %c0_137], %291 {strides = array<i32>} : memref<1x8x256xf32, #tpu.memory_space<vmem>>, vector<1x8x256xf32>,
      %cst_138 = arith.constant 0.000000e+00 : f32
      %293 = vector.broadcast %cst_138 : f32 to vector<1x16x256xf32>
      %c0_139 = arith.constant 0 : index
      %c0_140 = arith.constant 0 : index
      %c0_141 = arith.constant 0 : index
      %294 = vector.load %arg10[%c0_139, %c0_140, %c0_141] : memref<1x16x256xf32, #tpu.memory_space<vmem>>, vector<1x16x256xf32>
      tpu.vector_store %arg10[%c0_139, %c0_140, %c0_141], %293 {strides = array<i32>} : memref<1x16x256xf32, #tpu.memory_space<vmem>>, vector<1x16x256xf32>,
    } else {
    }
    %c0 = arith.constant 0 : index
    %c0_1 = arith.constant 0 : index
    %c0_2 = arith.constant 0 : index
    %c0_3 = arith.constant 0 : index
    %3 = vector.load %arg2[%c0, %c0_1, %c0_2, %c0_3] : memref<1x1x8x256xf32, #tpu.memory_space<vmem>>, vector<1x1x8x256xf32>
    %4 = vector.shape_cast %3 : vector<1x1x8x256xf32> to vector<1x8x256xf32>
    %c0_4 = arith.constant 0 : index
    %c0_5 = arith.constant 0 : index
    %c0_6 = arith.constant 0 : index
    %5 = vector.load %arg9[%c0_4, %c0_5, %c0_6] : memref<1x8x256xf32, #tpu.memory_space<vmem>>, vector<1x8x256xf32>
    %6 = arith.subf %4, %5 : vector<1x8x256xf32>
    %cst = arith.constant 5.000000e-01 : f32
    %7 = vector.broadcast %cst : f32 to vector<1x8x256xf32>
    %8 = arith.mulf %6, %7 : vector<1x8x256xf32>
    %9 = arith.addf %5, %8 : vector<1x8x256xf32>
    %cst_7 = arith.constant 1.000000e+00 : f32
    %10 = vector.broadcast %cst_7 : f32 to vector<1x8x256xf32>
    %11 = arith.cmpf oge, %9, %10 : vector<1x8x256xf32>
    %12 = arith.extui %11 : vector<1x8x256xi1> to vector<1x8x256xi32>
    %13 = arith.sitofp %12 : vector<1x8x256xi32> to vector<1x8x256xf32>
    %cst_8 = arith.constant 1.000000e+00 : f32
    %14 = vector.broadcast %cst_8 : f32 to vector<1x8x256xf32>
    %15 = arith.subf %14, %13 : vector<1x8x256xf32>
    %16 = arith.mulf %9, %15 : vector<1x8x256xf32>
    %c0_9 = arith.constant 0 : index
    %c0_10 = arith.constant 0 : index
    %c0_11 = arith.constant 0 : index
    %17 = vector.load %arg9[%c0_9, %c0_10, %c0_11] : memref<1x8x256xf32, #tpu.memory_space<vmem>>, vector<1x8x256xf32>
    tpu.vector_store %arg9[%c0_9, %c0_10, %c0_11], %16 {strides = array<i32>} : memref<1x8x256xf32, #tpu.memory_space<vmem>>, vector<1x8x256xf32>,
    %c0_12 = arith.constant 0 : index
    %c0_13 = arith.constant 0 : index
    %18 = vector.load %arg3[%c0_12, %c0_13] : memref<16x8xf32, #tpu.memory_space<vmem>>, vector<16x8xf32>
    %c0_14 = arith.constant 0 : index
    %c0_15 = arith.constant 0 : index
    %19 = vector.load %arg4[%c0_14, %c0_15] : memref<16x1xf32, #tpu.memory_space<vmem>>, vector<16x1xf32>
    %c0_16 = arith.constant 0 : index
    %c0_17 = arith.constant 0 : index
    %20 = vector.load %arg6[%c0_16, %c0_17] : memref<8x16xf32, #tpu.memory_space<vmem>>, vector<8x16xf32>
    %c0_18 = arith.constant 0 : index
    %c0_19 = arith.constant 0 : index
    %21 = vector.load %arg7[%c0_18, %c0_19] : memref<8x1xf32, #tpu.memory_space<vmem>>, vector<8x1xf32>
    %22 = vector.shape_cast %13 : vector<1x8x256xf32> to vector<8x256xf32>
    %cst_20 = arith.constant dense<0.000000e+00> : vector<16x256xf32>
    %23 = tpu.matmul %18, %22, %cst_20 {dimension_numbers = #tpu.dot_dimension_numbers<[1], [0], [0], [1], [0, 0, 1, 1], [], []>} : vector<16x8xf32>, vector<8x256xf32>, vector<16x256xf32> -> vector<16x256xf32>
    %24 = vector.broadcast %19 : vector<16x1xf32> to vector<16x256xf32>
    %25 = arith.addf %23, %24 : vector<16x256xf32>
    %c0_21 = arith.constant 0 : index
    %c0_22 = arith.constant 0 : index
    %c0_23 = arith.constant 0 : index
    %26 = vector.load %arg10[%c0_21, %c0_22, %c0_23] : memref<1x16x256xf32, #tpu.memory_space<vmem>>, vector<1x16x256xf32>
    %27 = vector.shape_cast %26 : vector<1x16x256xf32> to vector<16x256xf32>
    %28 = arith.subf %25, %27 : vector<16x256xf32>
    %cst_24 = arith.constant 5.000000e-01 : f32
    %29 = vector.broadcast %cst_24 : f32 to vector<16x256xf32>
    %30 = arith.mulf %28, %29 : vector<16x256xf32>
    %31 = arith.addf %27, %30 : vector<16x256xf32>
    %cst_25 = arith.constant 1.000000e+00 : f32
    %32 = vector.broadcast %cst_25 : f32 to vector<16x256xf32>
    %33 = arith.cmpf oge, %31, %32 : vector<16x256xf32>
    %34 = arith.extui %33 : vector<16x256xi1> to vector<16x256xi32>
    %35 = arith.sitofp %34 : vector<16x256xi32> to vector<16x256xf32>
    %cst_26 = arith.constant 1.000000e+00 : f32
    %36 = vector.broadcast %cst_26 : f32 to vector<16x256xf32>
    %37 = arith.subf %36, %35 : vector<16x256xf32>
    %38 = arith.mulf %31, %37 : vector<16x256xf32>
    %c0_27 = arith.constant 0 : index
    %c0_28 = arith.constant 0 : index
    %c0_29 = arith.constant 0 : index
    %39 = vector.load %arg10[%c0_27, %c0_28, %c0_29] : memref<1x16x256xf32, #tpu.memory_space<vmem>>, vector<1x16x256xf32>
    %40 = vector.shape_cast %39 : vector<1x16x256xf32> to vector<16x256xf32>
    %41 = vector.shape_cast %38 : vector<16x256xf32> to vector<1x16x256xf32>
    tpu.vector_store %arg10[%c0_27, %c0_28, %c0_29], %41 {strides = array<i32>} : memref<1x16x256xf32, #tpu.memory_space<vmem>>, vector<1x16x256xf32>,
    %c51_i32 = arith.constant 51 : i32
    %42 = tpu.dynamic_rotate %35 by %c51_i32 dim 1 : vector<16x256xf32>, i32 -> vector<16x256xf32>
    %c0_30 = arith.constant 0 : index
    %c0_31 = arith.constant 0 : index
    %c0_32 = arith.constant 0 : index
    %43 = vector.load %arg5[%c0_30, %c0_31, %c0_32] : memref<49x16x256xf32, #tpu.memory_space<vmem>>, vector<1x16x256xf32>
    %44 = vector.shape_cast %43 : vector<1x16x256xf32> to vector<16x256xf32>
    %45 = arith.mulf %42, %44 : vector<16x256xf32>
    %c50_i32 = arith.constant 50 : i32
    %46 = tpu.dynamic_rotate %35 by %c50_i32 dim 1 : vector<16x256xf32>, i32 -> vector<16x256xf32>
    %c1 = arith.constant 1 : index
    %c0_33 = arith.constant 0 : index
    %c0_34 = arith.constant 0 : index
    %47 = vector.load %arg5[%c1, %c0_33, %c0_34] : memref<49x16x256xf32, #tpu.memory_space<vmem>>, vector<1x16x256xf32>
    %48 = vector.shape_cast %47 : vector<1x16x256xf32> to vector<16x256xf32>
    %49 = arith.mulf %46, %48 : vector<16x256xf32>
    %50 = arith.addf %45, %49 : vector<16x256xf32>
    %c49_i32 = arith.constant 49 : i32
    %51 = tpu.dynamic_rotate %35 by %c49_i32 dim 1 : vector<16x256xf32>, i32 -> vector<16x256xf32>
    %c2 = arith.constant 2 : index
    %c0_35 = arith.constant 0 : index
    %c0_36 = arith.constant 0 : index
    %52 = vector.load %arg5[%c2, %c0_35, %c0_36] : memref<49x16x256xf32, #tpu.memory_space<vmem>>, vector<1x16x256xf32>
    %53 = vector.shape_cast %52 : vector<1x16x256xf32> to vector<16x256xf32>
    %54 = arith.mulf %51, %53 : vector<16x256xf32>
    %55 = arith.addf %50, %54 : vector<16x256xf32>
    %c48_i32 = arith.constant 48 : i32
    %56 = tpu.dynamic_rotate %35 by %c48_i32 dim 1 : vector<16x256xf32>, i32 -> vector<16x256xf32>
    %c3 = arith.constant 3 : index
    %c0_37 = arith.constant 0 : index
    %c0_38 = arith.constant 0 : index
    %57 = vector.load %arg5[%c3, %c0_37, %c0_38] : memref<49x16x256xf32, #tpu.memory_space<vmem>>, vector<1x16x256xf32>
    %58 = vector.shape_cast %57 : vector<1x16x256xf32> to vector<16x256xf32>
    %59 = arith.mulf %56, %58 : vector<16x256xf32>
    %60 = arith.addf %55, %59 : vector<16x256xf32>
    %c47_i32 = arith.constant 47 : i32
    %61 = tpu.dynamic_rotate %35 by %c47_i32 dim 1 : vector<16x256xf32>, i32 -> vector<16x256xf32>
    %c4 = arith.constant 4 : index
    %c0_39 = arith.constant 0 : index
    %c0_40 = arith.constant 0 : index
    %62 = vector.load %arg5[%c4, %c0_39, %c0_40] : memref<49x16x256xf32, #tpu.memory_space<vmem>>, vector<1x16x256xf32>
    %63 = vector.shape_cast %62 : vector<1x16x256xf32> to vector<16x256xf32>
    %64 = arith.mulf %61, %63 : vector<16x256xf32>
    %65 = arith.addf %60, %64 : vector<16x256xf32>
    %c46_i32 = arith.constant 46 : i32
    %66 = tpu.dynamic_rotate %35 by %c46_i32 dim 1 : vector<16x256xf32>, i32 -> vector<16x256xf32>
    %c5 = arith.constant 5 : index
    %c0_41 = arith.constant 0 : index
    %c0_42 = arith.constant 0 : index
    %67 = vector.load %arg5[%c5, %c0_41, %c0_42] : memref<49x16x256xf32, #tpu.memory_space<vmem>>, vector<1x16x256xf32>
    %68 = vector.shape_cast %67 : vector<1x16x256xf32> to vector<16x256xf32>
    %69 = arith.mulf %66, %68 : vector<16x256xf32>
    %70 = arith.addf %65, %69 : vector<16x256xf32>
    %c45_i32 = arith.constant 45 : i32
    %71 = tpu.dynamic_rotate %35 by %c45_i32 dim 1 : vector<16x256xf32>, i32 -> vector<16x256xf32>
    %c6 = arith.constant 6 : index
    %c0_43 = arith.constant 0 : index
    %c0_44 = arith.constant 0 : index
    %72 = vector.load %arg5[%c6, %c0_43, %c0_44] : memref<49x16x256xf32, #tpu.memory_space<vmem>>, vector<1x16x256xf32>
    %73 = vector.shape_cast %72 : vector<1x16x256xf32> to vector<16x256xf32>
    %74 = arith.mulf %71, %73 : vector<16x256xf32>
    %75 = arith.addf %70, %74 : vector<16x256xf32>
    %c35_i32 = arith.constant 35 : i32
    %76 = tpu.dynamic_rotate %35 by %c35_i32 dim 1 : vector<16x256xf32>, i32 -> vector<16x256xf32>
    %c7 = arith.constant 7 : index
    %c0_45 = arith.constant 0 : index
    %c0_46 = arith.constant 0 : index
    %77 = vector.load %arg5[%c7, %c0_45, %c0_46] : memref<49x16x256xf32, #tpu.memory_space<vmem>>, vector<1x16x256xf32>
    %78 = vector.shape_cast %77 : vector<1x16x256xf32> to vector<16x256xf32>
    %79 = arith.mulf %76, %78 : vector<16x256xf32>
    %80 = arith.addf %75, %79 : vector<16x256xf32>
    %c34_i32 = arith.constant 34 : i32
    %81 = tpu.dynamic_rotate %35 by %c34_i32 dim 1 : vector<16x256xf32>, i32 -> vector<16x256xf32>
    %c8 = arith.constant 8 : index
    %c0_47 = arith.constant 0 : index
    %c0_48 = arith.constant 0 : index
    %82 = vector.load %arg5[%c8, %c0_47, %c0_48] : memref<49x16x256xf32, #tpu.memory_space<vmem>>, vector<1x16x256xf32>
    %83 = vector.shape_cast %82 : vector<1x16x256xf32> to vector<16x256xf32>
    %84 = arith.mulf %81, %83 : vector<16x256xf32>
    %85 = arith.addf %80, %84 : vector<16x256xf32>
    %c33_i32 = arith.constant 33 : i32
    %86 = tpu.dynamic_rotate %35 by %c33_i32 dim 1 : vector<16x256xf32>, i32 -> vector<16x256xf32>
    %c9 = arith.constant 9 : index
    %c0_49 = arith.constant 0 : index
    %c0_50 = arith.constant 0 : index
    %87 = vector.load %arg5[%c9, %c0_49, %c0_50] : memref<49x16x256xf32, #tpu.memory_space<vmem>>, vector<1x16x256xf32>
    %88 = vector.shape_cast %87 : vector<1x16x256xf32> to vector<16x256xf32>
    %89 = arith.mulf %86, %88 : vector<16x256xf32>
    %90 = arith.addf %85, %89 : vector<16x256xf32>
    %c32_i32 = arith.constant 32 : i32
    %91 = tpu.dynamic_rotate %35 by %c32_i32 dim 1 : vector<16x256xf32>, i32 -> vector<16x256xf32>
    %c10 = arith.constant 10 : index
    %c0_51 = arith.constant 0 : index
    %c0_52 = arith.constant 0 : index
    %92 = vector.load %arg5[%c10, %c0_51, %c0_52] : memref<49x16x256xf32, #tpu.memory_space<vmem>>, vector<1x16x256xf32>
    %93 = vector.shape_cast %92 : vector<1x16x256xf32> to vector<16x256xf32>
    %94 = arith.mulf %91, %93 : vector<16x256xf32>
    %95 = arith.addf %90, %94 : vector<16x256xf32>
    %c31_i32 = arith.constant 31 : i32
    %96 = tpu.dynamic_rotate %35 by %c31_i32 dim 1 : vector<16x256xf32>, i32 -> vector<16x256xf32>
    %c11 = arith.constant 11 : index
    %c0_53 = arith.constant 0 : index
    %c0_54 = arith.constant 0 : index
    %97 = vector.load %arg5[%c11, %c0_53, %c0_54] : memref<49x16x256xf32, #tpu.memory_space<vmem>>, vector<1x16x256xf32>
    %98 = vector.shape_cast %97 : vector<1x16x256xf32> to vector<16x256xf32>
    %99 = arith.mulf %96, %98 : vector<16x256xf32>
    %100 = arith.addf %95, %99 : vector<16x256xf32>
    %c30_i32 = arith.constant 30 : i32
    %101 = tpu.dynamic_rotate %35 by %c30_i32 dim 1 : vector<16x256xf32>, i32 -> vector<16x256xf32>
    %c12 = arith.constant 12 : index
    %c0_55 = arith.constant 0 : index
    %c0_56 = arith.constant 0 : index
    %102 = vector.load %arg5[%c12, %c0_55, %c0_56] : memref<49x16x256xf32, #tpu.memory_space<vmem>>, vector<1x16x256xf32>
    %103 = vector.shape_cast %102 : vector<1x16x256xf32> to vector<16x256xf32>
    %104 = arith.mulf %101, %103 : vector<16x256xf32>
    %105 = arith.addf %100, %104 : vector<16x256xf32>
    %c29_i32 = arith.constant 29 : i32
    %106 = tpu.dynamic_rotate %35 by %c29_i32 dim 1 : vector<16x256xf32>, i32 -> vector<16x256xf32>
    %c13 = arith.constant 13 : index
    %c0_57 = arith.constant 0 : index
    %c0_58 = arith.constant 0 : index
    %107 = vector.load %arg5[%c13, %c0_57, %c0_58] : memref<49x16x256xf32, #tpu.memory_space<vmem>>, vector<1x16x256xf32>
    %108 = vector.shape_cast %107 : vector<1x16x256xf32> to vector<16x256xf32>
    %109 = arith.mulf %106, %108 : vector<16x256xf32>
    %110 = arith.addf %105, %109 : vector<16x256xf32>
    %c19_i32 = arith.constant 19 : i32
    %111 = tpu.dynamic_rotate %35 by %c19_i32 dim 1 : vector<16x256xf32>, i32 -> vector<16x256xf32>
    %c14 = arith.constant 14 : index
    %c0_59 = arith.constant 0 : index
    %c0_60 = arith.constant 0 : index
    %112 = vector.load %arg5[%c14, %c0_59, %c0_60] : memref<49x16x256xf32, #tpu.memory_space<vmem>>, vector<1x16x256xf32>
    %113 = vector.shape_cast %112 : vector<1x16x256xf32> to vector<16x256xf32>
    %114 = arith.mulf %111, %113 : vector<16x256xf32>
    %115 = arith.addf %110, %114 : vector<16x256xf32>
    %c18_i32 = arith.constant 18 : i32
    %116 = tpu.dynamic_rotate %35 by %c18_i32 dim 1 : vector<16x256xf32>, i32 -> vector<16x256xf32>
    %c15 = arith.constant 15 : index
    %c0_61 = arith.constant 0 : index
    %c0_62 = arith.constant 0 : index
    %117 = vector.load %arg5[%c15, %c0_61, %c0_62] : memref<49x16x256xf32, #tpu.memory_space<vmem>>, vector<1x16x256xf32>
    %118 = vector.shape_cast %117 : vector<1x16x256xf32> to vector<16x256xf32>
    %119 = arith.mulf %116, %118 : vector<16x256xf32>
    %120 = arith.addf %115, %119 : vector<16x256xf32>
    %c17_i32 = arith.constant 17 : i32
    %121 = tpu.dynamic_rotate %35 by %c17_i32 dim 1 : vector<16x256xf32>, i32 -> vector<16x256xf32>
    %c16 = arith.constant 16 : index
    %c0_63 = arith.constant 0 : index
    %c0_64 = arith.constant 0 : index
    %122 = vector.load %arg5[%c16, %c0_63, %c0_64] : memref<49x16x256xf32, #tpu.memory_space<vmem>>, vector<1x16x256xf32>
    %123 = vector.shape_cast %122 : vector<1x16x256xf32> to vector<16x256xf32>
    %124 = arith.mulf %121, %123 : vector<16x256xf32>
    %125 = arith.addf %120, %124 : vector<16x256xf32>
    %c16_i32 = arith.constant 16 : i32
    %126 = tpu.dynamic_rotate %35 by %c16_i32 dim 1 : vector<16x256xf32>, i32 -> vector<16x256xf32>
    %c17 = arith.constant 17 : index
    %c0_65 = arith.constant 0 : index
    %c0_66 = arith.constant 0 : index
    %127 = vector.load %arg5[%c17, %c0_65, %c0_66] : memref<49x16x256xf32, #tpu.memory_space<vmem>>, vector<1x16x256xf32>
    %128 = vector.shape_cast %127 : vector<1x16x256xf32> to vector<16x256xf32>
    %129 = arith.mulf %126, %128 : vector<16x256xf32>
    %130 = arith.addf %125, %129 : vector<16x256xf32>
    %c15_i32 = arith.constant 15 : i32
    %131 = tpu.dynamic_rotate %35 by %c15_i32 dim 1 : vector<16x256xf32>, i32 -> vector<16x256xf32>
    %c18 = arith.constant 18 : index
    %c0_67 = arith.constant 0 : index
    %c0_68 = arith.constant 0 : index
    %132 = vector.load %arg5[%c18, %c0_67, %c0_68] : memref<49x16x256xf32, #tpu.memory_space<vmem>>, vector<1x16x256xf32>
    %133 = vector.shape_cast %132 : vector<1x16x256xf32> to vector<16x256xf32>
    %134 = arith.mulf %131, %133 : vector<16x256xf32>
    %135 = arith.addf %130, %134 : vector<16x256xf32>
    %c14_i32 = arith.constant 14 : i32
    %136 = tpu.dynamic_rotate %35 by %c14_i32 dim 1 : vector<16x256xf32>, i32 -> vector<16x256xf32>
    %c19 = arith.constant 19 : index
    %c0_69 = arith.constant 0 : index
    %c0_70 = arith.constant 0 : index
    %137 = vector.load %arg5[%c19, %c0_69, %c0_70] : memref<49x16x256xf32, #tpu.memory_space<vmem>>, vector<1x16x256xf32>
    %138 = vector.shape_cast %137 : vector<1x16x256xf32> to vector<16x256xf32>
    %139 = arith.mulf %136, %138 : vector<16x256xf32>
    %140 = arith.addf %135, %139 : vector<16x256xf32>
    %c13_i32 = arith.constant 13 : i32
    %141 = tpu.dynamic_rotate %35 by %c13_i32 dim 1 : vector<16x256xf32>, i32 -> vector<16x256xf32>
    %c20 = arith.constant 20 : index
    %c0_71 = arith.constant 0 : index
    %c0_72 = arith.constant 0 : index
    %142 = vector.load %arg5[%c20, %c0_71, %c0_72] : memref<49x16x256xf32, #tpu.memory_space<vmem>>, vector<1x16x256xf32>
    %143 = vector.shape_cast %142 : vector<1x16x256xf32> to vector<16x256xf32>
    %144 = arith.mulf %141, %143 : vector<16x256xf32>
    %145 = arith.addf %140, %144 : vector<16x256xf32>
    %c3_i32 = arith.constant 3 : i32
    %146 = tpu.dynamic_rotate %35 by %c3_i32 dim 1 : vector<16x256xf32>, i32 -> vector<16x256xf32>
    %c21 = arith.constant 21 : index
    %c0_73 = arith.constant 0 : index
    %c0_74 = arith.constant 0 : index
    %147 = vector.load %arg5[%c21, %c0_73, %c0_74] : memref<49x16x256xf32, #tpu.memory_space<vmem>>, vector<1x16x256xf32>
    %148 = vector.shape_cast %147 : vector<1x16x256xf32> to vector<16x256xf32>
    %149 = arith.mulf %146, %148 : vector<16x256xf32>
    %150 = arith.addf %145, %149 : vector<16x256xf32>
    %c2_i32 = arith.constant 2 : i32
    %151 = tpu.dynamic_rotate %35 by %c2_i32 dim 1 : vector<16x256xf32>, i32 -> vector<16x256xf32>
    %c22 = arith.constant 22 : index
    %c0_75 = arith.constant 0 : index
    %c0_76 = arith.constant 0 : index
    %152 = vector.load %arg5[%c22, %c0_75, %c0_76] : memref<49x16x256xf32, #tpu.memory_space<vmem>>, vector<1x16x256xf32>
    %153 = vector.shape_cast %152 : vector<1x16x256xf32> to vector<16x256xf32>
    %154 = arith.mulf %151, %153 : vector<16x256xf32>
    %155 = arith.addf %150, %154 : vector<16x256xf32>
    %c1_i32 = arith.constant 1 : i32
    %156 = tpu.dynamic_rotate %35 by %c1_i32 dim 1 : vector<16x256xf32>, i32 -> vector<16x256xf32>
    %c23 = arith.constant 23 : index
    %c0_77 = arith.constant 0 : index
    %c0_78 = arith.constant 0 : index
    %157 = vector.load %arg5[%c23, %c0_77, %c0_78] : memref<49x16x256xf32, #tpu.memory_space<vmem>>, vector<1x16x256xf32>
    %158 = vector.shape_cast %157 : vector<1x16x256xf32> to vector<16x256xf32>
    %159 = arith.mulf %156, %158 : vector<16x256xf32>
    %160 = arith.addf %155, %159 : vector<16x256xf32>
    %c24 = arith.constant 24 : index
    %c0_79 = arith.constant 0 : index
    %c0_80 = arith.constant 0 : index
    %161 = vector.load %arg5[%c24, %c0_79, %c0_80] : memref<49x16x256xf32, #tpu.memory_space<vmem>>, vector<1x16x256xf32>
    %162 = vector.shape_cast %161 : vector<1x16x256xf32> to vector<16x256xf32>
    %163 = arith.mulf %35, %162 : vector<16x256xf32>
    %164 = arith.addf %160, %163 : vector<16x256xf32>
    %c255_i32 = arith.constant 255 : i32
    %165 = tpu.dynamic_rotate %35 by %c255_i32 dim 1 : vector<16x256xf32>, i32 -> vector<16x256xf32>
    %c25 = arith.constant 25 : index
    %c0_81 = arith.constant 0 : index
    %c0_82 = arith.constant 0 : index
    %166 = vector.load %arg5[%c25, %c0_81, %c0_82] : memref<49x16x256xf32, #tpu.memory_space<vmem>>, vector<1x16x256xf32>
    %167 = vector.shape_cast %166 : vector<1x16x256xf32> to vector<16x256xf32>
    %168 = arith.mulf %165, %167 : vector<16x256xf32>
    %169 = arith.addf %164, %168 : vector<16x256xf32>
    %c254_i32 = arith.constant 254 : i32
    %170 = tpu.dynamic_rotate %35 by %c254_i32 dim 1 : vector<16x256xf32>, i32 -> vector<16x256xf32>
    %c26 = arith.constant 26 : index
    %c0_83 = arith.constant 0 : index
    %c0_84 = arith.constant 0 : index
    %171 = vector.load %arg5[%c26, %c0_83, %c0_84] : memref<49x16x256xf32, #tpu.memory_space<vmem>>, vector<1x16x256xf32>
    %172 = vector.shape_cast %171 : vector<1x16x256xf32> to vector<16x256xf32>
    %173 = arith.mulf %170, %172 : vector<16x256xf32>
    %174 = arith.addf %169, %173 : vector<16x256xf32>
    %c253_i32 = arith.constant 253 : i32
    %175 = tpu.dynamic_rotate %35 by %c253_i32 dim 1 : vector<16x256xf32>, i32 -> vector<16x256xf32>
    %c27 = arith.constant 27 : index
    %c0_85 = arith.constant 0 : index
    %c0_86 = arith.constant 0 : index
    %176 = vector.load %arg5[%c27, %c0_85, %c0_86] : memref<49x16x256xf32, #tpu.memory_space<vmem>>, vector<1x16x256xf32>
    %177 = vector.shape_cast %176 : vector<1x16x256xf32> to vector<16x256xf32>
    %178 = arith.mulf %175, %177 : vector<16x256xf32>
    %179 = arith.addf %174, %178 : vector<16x256xf32>
    %c243_i32 = arith.constant 243 : i32
    %180 = tpu.dynamic_rotate %35 by %c243_i32 dim 1 : vector<16x256xf32>, i32 -> vector<16x256xf32>
    %c28 = arith.constant 28 : index
    %c0_87 = arith.constant 0 : index
    %c0_88 = arith.constant 0 : index
    %181 = vector.load %arg5[%c28, %c0_87, %c0_88] : memref<49x16x256xf32, #tpu.memory_space<vmem>>, vector<1x16x256xf32>
    %182 = vector.shape_cast %181 : vector<1x16x256xf32> to vector<16x256xf32>
    %183 = arith.mulf %180, %182 : vector<16x256xf32>
    %184 = arith.addf %179, %183 : vector<16x256xf32>
    %c242_i32 = arith.constant 242 : i32
    %185 = tpu.dynamic_rotate %35 by %c242_i32 dim 1 : vector<16x256xf32>, i32 -> vector<16x256xf32>
    %c29 = arith.constant 29 : index
    %c0_89 = arith.constant 0 : index
    %c0_90 = arith.constant 0 : index
    %186 = vector.load %arg5[%c29, %c0_89, %c0_90] : memref<49x16x256xf32, #tpu.memory_space<vmem>>, vector<1x16x256xf32>
    %187 = vector.shape_cast %186 : vector<1x16x256xf32> to vector<16x256xf32>
    %188 = arith.mulf %185, %187 : vector<16x256xf32>
    %189 = arith.addf %184, %188 : vector<16x256xf32>
    %c241_i32 = arith.constant 241 : i32
    %190 = tpu.dynamic_rotate %35 by %c241_i32 dim 1 : vector<16x256xf32>, i32 -> vector<16x256xf32>
    %c30 = arith.constant 30 : index
    %c0_91 = arith.constant 0 : index
    %c0_92 = arith.constant 0 : index
    %191 = vector.load %arg5[%c30, %c0_91, %c0_92] : memref<49x16x256xf32, #tpu.memory_space<vmem>>, vector<1x16x256xf32>
    %192 = vector.shape_cast %191 : vector<1x16x256xf32> to vector<16x256xf32>
    %193 = arith.mulf %190, %192 : vector<16x256xf32>
    %194 = arith.addf %189, %193 : vector<16x256xf32>
    %c240_i32 = arith.constant 240 : i32
    %195 = tpu.dynamic_rotate %35 by %c240_i32 dim 1 : vector<16x256xf32>, i32 -> vector<16x256xf32>
    %c31 = arith.constant 31 : index
    %c0_93 = arith.constant 0 : index
    %c0_94 = arith.constant 0 : index
    %196 = vector.load %arg5[%c31, %c0_93, %c0_94] : memref<49x16x256xf32, #tpu.memory_space<vmem>>, vector<1x16x256xf32>
    %197 = vector.shape_cast %196 : vector<1x16x256xf32> to vector<16x256xf32>
    %198 = arith.mulf %195, %197 : vector<16x256xf32>
    %199 = arith.addf %194, %198 : vector<16x256xf32>
    %c239_i32 = arith.constant 239 : i32
    %200 = tpu.dynamic_rotate %35 by %c239_i32 dim 1 : vector<16x256xf32>, i32 -> vector<16x256xf32>
    %c32 = arith.constant 32 : index
    %c0_95 = arith.constant 0 : index
    %c0_96 = arith.constant 0 : index
    %201 = vector.load %arg5[%c32, %c0_95, %c0_96] : memref<49x16x256xf32, #tpu.memory_space<vmem>>, vector<1x16x256xf32>
    %202 = vector.shape_cast %201 : vector<1x16x256xf32> to vector<16x256xf32>
    %203 = arith.mulf %200, %202 : vector<16x256xf32>
    %204 = arith.addf %199, %203 : vector<16x256xf32>
    %c238_i32 = arith.constant 238 : i32
    %205 = tpu.dynamic_rotate %35 by %c238_i32 dim 1 : vector<16x256xf32>, i32 -> vector<16x256xf32>
    %c33 = arith.constant 33 : index
    %c0_97 = arith.constant 0 : index
    %c0_98 = arith.constant 0 : index
    %206 = vector.load %arg5[%c33, %c0_97, %c0_98] : memref<49x16x256xf32, #tpu.memory_space<vmem>>, vector<1x16x256xf32>
    %207 = vector.shape_cast %206 : vector<1x16x256xf32> to vector<16x256xf32>
    %208 = arith.mulf %205, %207 : vector<16x256xf32>
    %209 = arith.addf %204, %208 : vector<16x256xf32>
    %c237_i32 = arith.constant 237 : i32
    %210 = tpu.dynamic_rotate %35 by %c237_i32 dim 1 : vector<16x256xf32>, i32 -> vector<16x256xf32>
    %c34 = arith.constant 34 : index
    %c0_99 = arith.constant 0 : index
    %c0_100 = arith.constant 0 : index
    %211 = vector.load %arg5[%c34, %c0_99, %c0_100] : memref<49x16x256xf32, #tpu.memory_space<vmem>>, vector<1x16x256xf32>
    %212 = vector.shape_cast %211 : vector<1x16x256xf32> to vector<16x256xf32>
    %213 = arith.mulf %210, %212 : vector<16x256xf32>
    %214 = arith.addf %209, %213 : vector<16x256xf32>
    %c227_i32 = arith.constant 227 : i32
    %215 = tpu.dynamic_rotate %35 by %c227_i32 dim 1 : vector<16x256xf32>, i32 -> vector<16x256xf32>
    %c35 = arith.constant 35 : index
    %c0_101 = arith.constant 0 : index
    %c0_102 = arith.constant 0 : index
    %216 = vector.load %arg5[%c35, %c0_101, %c0_102] : memref<49x16x256xf32, #tpu.memory_space<vmem>>, vector<1x16x256xf32>
    %217 = vector.shape_cast %216 : vector<1x16x256xf32> to vector<16x256xf32>
    %218 = arith.mulf %215, %217 : vector<16x256xf32>
    %219 = arith.addf %214, %218 : vector<16x256xf32>
    %c226_i32 = arith.constant 226 : i32
    %220 = tpu.dynamic_rotate %35 by %c226_i32 dim 1 : vector<16x256xf32>, i32 -> vector<16x256xf32>
    %c36 = arith.constant 36 : index
    %c0_103 = arith.constant 0 : index
    %c0_104 = arith.constant 0 : index
    %221 = vector.load %arg5[%c36, %c0_103, %c0_104] : memref<49x16x256xf32, #tpu.memory_space<vmem>>, vector<1x16x256xf32>
    %222 = vector.shape_cast %221 : vector<1x16x256xf32> to vector<16x256xf32>
    %223 = arith.mulf %220, %222 : vector<16x256xf32>
    %224 = arith.addf %219, %223 : vector<16x256xf32>
    %c225_i32 = arith.constant 225 : i32
    %225 = tpu.dynamic_rotate %35 by %c225_i32 dim 1 : vector<16x256xf32>, i32 -> vector<16x256xf32>
    %c37 = arith.constant 37 : index
    %c0_105 = arith.constant 0 : index
    %c0_106 = arith.constant 0 : index
    %226 = vector.load %arg5[%c37, %c0_105, %c0_106] : memref<49x16x256xf32, #tpu.memory_space<vmem>>, vector<1x16x256xf32>
    %227 = vector.shape_cast %226 : vector<1x16x256xf32> to vector<16x256xf32>
    %228 = arith.mulf %225, %227 : vector<16x256xf32>
    %229 = arith.addf %224, %228 : vector<16x256xf32>
    %c224_i32 = arith.constant 224 : i32
    %230 = tpu.dynamic_rotate %35 by %c224_i32 dim 1 : vector<16x256xf32>, i32 -> vector<16x256xf32>
    %c38 = arith.constant 38 : index
    %c0_107 = arith.constant 0 : index
    %c0_108 = arith.constant 0 : index
    %231 = vector.load %arg5[%c38, %c0_107, %c0_108] : memref<49x16x256xf32, #tpu.memory_space<vmem>>, vector<1x16x256xf32>
    %232 = vector.shape_cast %231 : vector<1x16x256xf32> to vector<16x256xf32>
    %233 = arith.mulf %230, %232 : vector<16x256xf32>
    %234 = arith.addf %229, %233 : vector<16x256xf32>
    %c223_i32 = arith.constant 223 : i32
    %235 = tpu.dynamic_rotate %35 by %c223_i32 dim 1 : vector<16x256xf32>, i32 -> vector<16x256xf32>
    %c39 = arith.constant 39 : index
    %c0_109 = arith.constant 0 : index
    %c0_110 = arith.constant 0 : index
    %236 = vector.load %arg5[%c39, %c0_109, %c0_110] : memref<49x16x256xf32, #tpu.memory_space<vmem>>, vector<1x16x256xf32>
    %237 = vector.shape_cast %236 : vector<1x16x256xf32> to vector<16x256xf32>
    %238 = arith.mulf %235, %237 : vector<16x256xf32>
    %239 = arith.addf %234, %238 : vector<16x256xf32>
    %c222_i32 = arith.constant 222 : i32
    %240 = tpu.dynamic_rotate %35 by %c222_i32 dim 1 : vector<16x256xf32>, i32 -> vector<16x256xf32>
    %c40 = arith.constant 40 : index
    %c0_111 = arith.constant 0 : index
    %c0_112 = arith.constant 0 : index
    %241 = vector.load %arg5[%c40, %c0_111, %c0_112] : memref<49x16x256xf32, #tpu.memory_space<vmem>>, vector<1x16x256xf32>
    %242 = vector.shape_cast %241 : vector<1x16x256xf32> to vector<16x256xf32>
    %243 = arith.mulf %240, %242 : vector<16x256xf32>
    %244 = arith.addf %239, %243 : vector<16x256xf32>
    %c221_i32 = arith.constant 221 : i32
    %245 = tpu.dynamic_rotate %35 by %c221_i32 dim 1 : vector<16x256xf32>, i32 -> vector<16x256xf32>
    %c41 = arith.constant 41 : index
    %c0_113 = arith.constant 0 : index
    %c0_114 = arith.constant 0 : index
    %246 = vector.load %arg5[%c41, %c0_113, %c0_114] : memref<49x16x256xf32, #tpu.memory_space<vmem>>, vector<1x16x256xf32>
    %247 = vector.shape_cast %246 : vector<1x16x256xf32> to vector<16x256xf32>
    %248 = arith.mulf %245, %247 : vector<16x256xf32>
    %249 = arith.addf %244, %248 : vector<16x256xf32>
    %c211_i32 = arith.constant 211 : i32
    %250 = tpu.dynamic_rotate %35 by %c211_i32 dim 1 : vector<16x256xf32>, i32 -> vector<16x256xf32>
    %c42 = arith.constant 42 : index
    %c0_115 = arith.constant 0 : index
    %c0_116 = arith.constant 0 : index
    %251 = vector.load %arg5[%c42, %c0_115, %c0_116] : memref<49x16x256xf32, #tpu.memory_space<vmem>>, vector<1x16x256xf32>
    %252 = vector.shape_cast %251 : vector<1x16x256xf32> to vector<16x256xf32>
    %253 = arith.mulf %250, %252 : vector<16x256xf32>
    %254 = arith.addf %249, %253 : vector<16x256xf32>
    %c210_i32 = arith.constant 210 : i32
    %255 = tpu.dynamic_rotate %35 by %c210_i32 dim 1 : vector<16x256xf32>, i32 -> vector<16x256xf32>
    %c43 = arith.constant 43 : index
    %c0_117 = arith.constant 0 : index
    %c0_118 = arith.constant 0 : index
    %256 = vector.load %arg5[%c43, %c0_117, %c0_118] : memref<49x16x256xf32, #tpu.memory_space<vmem>>, vector<1x16x256xf32>
    %257 = vector.shape_cast %256 : vector<1x16x256xf32> to vector<16x256xf32>
    %258 = arith.mulf %255, %257 : vector<16x256xf32>
    %259 = arith.addf %254, %258 : vector<16x256xf32>
    %c209_i32 = arith.constant 209 : i32
    %260 = tpu.dynamic_rotate %35 by %c209_i32 dim 1 : vector<16x256xf32>, i32 -> vector<16x256xf32>
    %c44 = arith.constant 44 : index
    %c0_119 = arith.constant 0 : index
    %c0_120 = arith.constant 0 : index
    %261 = vector.load %arg5[%c44, %c0_119, %c0_120] : memref<49x16x256xf32, #tpu.memory_space<vmem>>, vector<1x16x256xf32>
    %262 = vector.shape_cast %261 : vector<1x16x256xf32> to vector<16x256xf32>
    %263 = arith.mulf %260, %262 : vector<16x256xf32>
    %264 = arith.addf %259, %263 : vector<16x256xf32>
    %c208_i32 = arith.constant 208 : i32
    %265 = tpu.dynamic_rotate %35 by %c208_i32 dim 1 : vector<16x256xf32>, i32 -> vector<16x256xf32>
    %c45 = arith.constant 45 : index
    %c0_121 = arith.constant 0 : index
    %c0_122 = arith.constant 0 : index
    %266 = vector.load %arg5[%c45, %c0_121, %c0_122] : memref<49x16x256xf32, #tpu.memory_space<vmem>>, vector<1x16x256xf32>
    %267 = vector.shape_cast %266 : vector<1x16x256xf32> to vector<16x256xf32>
    %268 = arith.mulf %265, %267 : vector<16x256xf32>
    %269 = arith.addf %264, %268 : vector<16x256xf32>
    %c207_i32 = arith.constant 207 : i32
    %270 = tpu.dynamic_rotate %35 by %c207_i32 dim 1 : vector<16x256xf32>, i32 -> vector<16x256xf32>
    %c46 = arith.constant 46 : index
    %c0_123 = arith.constant 0 : index
    %c0_124 = arith.constant 0 : index
    %271 = vector.load %arg5[%c46, %c0_123, %c0_124] : memref<49x16x256xf32, #tpu.memory_space<vmem>>, vector<1x16x256xf32>
    %272 = vector.shape_cast %271 : vector<1x16x256xf32> to vector<16x256xf32>
    %273 = arith.mulf %270, %272 : vector<16x256xf32>
    %274 = arith.addf %269, %273 : vector<16x256xf32>
    %c206_i32 = arith.constant 206 : i32
    %275 = tpu.dynamic_rotate %35 by %c206_i32 dim 1 : vector<16x256xf32>, i32 -> vector<16x256xf32>
    %c47 = arith.constant 47 : index
    %c0_125 = arith.constant 0 : index
    %c0_126 = arith.constant 0 : index
    %276 = vector.load %arg5[%c47, %c0_125, %c0_126] : memref<49x16x256xf32, #tpu.memory_space<vmem>>, vector<1x16x256xf32>
    %277 = vector.shape_cast %276 : vector<1x16x256xf32> to vector<16x256xf32>
    %278 = arith.mulf %275, %277 : vector<16x256xf32>
    %279 = arith.addf %274, %278 : vector<16x256xf32>
    %c205_i32 = arith.constant 205 : i32
    %280 = tpu.dynamic_rotate %35 by %c205_i32 dim 1 : vector<16x256xf32>, i32 -> vector<16x256xf32>
    %c48 = arith.constant 48 : index
    %c0_127 = arith.constant 0 : index
    %c0_128 = arith.constant 0 : index
    %281 = vector.load %arg5[%c48, %c0_127, %c0_128] : memref<49x16x256xf32, #tpu.memory_space<vmem>>, vector<1x16x256xf32>
    %282 = vector.shape_cast %281 : vector<1x16x256xf32> to vector<16x256xf32>
    %283 = arith.mulf %280, %282 : vector<16x256xf32>
    %284 = arith.addf %279, %283 : vector<16x256xf32>
    %cst_129 = arith.constant dense<0.000000e+00> : vector<8x256xf32>
    %285 = tpu.matmul %20, %284, %cst_129 {dimension_numbers = #tpu.dot_dimension_numbers<[1], [0], [0], [1], [0, 0, 1, 1], [], []>} : vector<8x16xf32>, vector<16x256xf32>, vector<8x256xf32> -> vector<8x256xf32>
    %286 = vector.broadcast %21 : vector<8x1xf32> to vector<8x256xf32>
    %287 = arith.addf %285, %286 : vector<8x256xf32>
    %c0_130 = arith.constant 0 : index
    %c0_131 = arith.constant 0 : index
    %c0_132 = arith.constant 0 : index
    %c0_133 = arith.constant 0 : index
    %288 = vector.load %arg8[%c0_130, %c0_131, %c0_132, %c0_133] : memref<1x1x8x256xf32, #tpu.memory_space<vmem>>, vector<1x1x8x256xf32>
    %289 = vector.shape_cast %288 : vector<1x1x8x256xf32> to vector<8x256xf32>
    %290 = vector.shape_cast %287 : vector<8x256xf32> to vector<1x1x8x256xf32>
    tpu.vector_store %arg8[%c0_130, %c0_131, %c0_132, %c0_133], %290 {strides = array<i32>} : memref<1x1x8x256xf32, #tpu.memory_space<vmem>>, vector<1x1x8x256xf32>,
    return
  }
  func.func @transform_0(%arg0: i32, %arg1: i32) -> (i32, i32, i32, i32) {
    %c0_i32 = arith.constant 0 : i32
    %c0_i32_0 = arith.constant 0 : i32
    %c0_i32_1 = arith.constant 0 : i32
    return %arg1, %arg0, %c0_i32, %c0_i32_0 : i32, i32, i32, i32
  }
  func.func @transform_1(%arg0: i32, %arg1: i32) -> (i32, i32) {
    %c0_i32 = arith.constant 0 : i32
    %c0_i32_0 = arith.constant 0 : i32
    %c0_i32_1 = arith.constant 0 : i32
    return %c0_i32, %c0_i32_0 : i32, i32
  }
  func.func @transform_2(%arg0: i32, %arg1: i32) -> (i32, i32) {
    %c0_i32 = arith.constant 0 : i32
    %c0_i32_0 = arith.constant 0 : i32
    %c0_i32_1 = arith.constant 0 : i32
    return %c0_i32, %c0_i32_0 : i32, i32
  }
  func.func @transform_3(%arg0: i32, %arg1: i32) -> (i32, i32, i32) {
    %c0_i32 = arith.constant 0 : i32
    %c0_i32_0 = arith.constant 0 : i32
    %c0_i32_1 = arith.constant 0 : i32
    %c0_i32_2 = arith.constant 0 : i32
    return %c0_i32, %c0_i32_0, %c0_i32_1 : i32, i32, i32
  }
  func.func @transform_4(%arg0: i32, %arg1: i32) -> (i32, i32) {
    %c0_i32 = arith.constant 0 : i32
    %c0_i32_0 = arith.constant 0 : i32
    %c0_i32_1 = arith.constant 0 : i32
    return %c0_i32, %c0_i32_0 : i32, i32
  }
  func.func @transform_5(%arg0: i32, %arg1: i32) -> (i32, i32) {
    %c0_i32 = arith.constant 0 : i32
    %c0_i32_0 = arith.constant 0 : i32
    %c0_i32_1 = arith.constant 0 : i32
    return %c0_i32, %c0_i32_0 : i32, i32
  }
  func.func @transform_6(%arg0: i32, %arg1: i32) -> (i32, i32, i32, i32) {
    %c0_i32 = arith.constant 0 : i32
    %c0_i32_0 = arith.constant 0 : i32
    %c0_i32_1 = arith.constant 0 : i32
    return %arg1, %arg0, %c0_i32, %c0_i32_0 : i32, i32, i32, i32
  }
}

</mosaic_0001>

<llo_original>
// kernel: sepconv_forward.1
$region0: #{sepconv_forward.1}
  #allocation0 [shape = 'u32[]', space=smem, size = 0x4, offset = 0x4, fixed_abs, tag = 'smem constant byte address 0x4 - core index']
  #allocation1 [shape = 'u32[144,128]{1,0:T(1,128)}', space=vmem, size = 0x12000, scoped, tag = 'internal scratch']
  #allocation2 [shape = 'f32[1,8,256]{2,1,0:T(8,128)}', space=vmem, size = 0x2000, scoped, tag = 'scratch operand']
  #allocation3 [shape = 'f32[1,16,256]{2,1,0:T(8,128)}', space=vmem, size = 0x4000, scoped, tag = 'scratch operand']
  %s0 = inlined_call_operand.vmem [shape: f32[4,2,8,256], index: 0, kind: input, shape index: {}]
  %s1 = inlined_call_operand.vmem [shape: f32[16,8], index: 1, kind: input, shape index: {}]
  %s2 = inlined_call_operand.vmem [shape: f32[16,1], index: 2, kind: input, shape index: {}]
  %s3 = inlined_call_operand.hbm [shape: f32[49,16,256], index: 3, kind: input, shape index: {}]
  %s4 = inlined_call_operand.vmem [shape: f32[8,16], index: 4, kind: input, shape index: {}]
  %s5 = inlined_call_operand.vmem [shape: f32[8,1], index: 5, kind: input, shape index: {}]
  %s6 = inlined_call_operand.vmem [shape: f32[4,2,8,256], index: 6, kind: output, shape index: {}]
  %s7 = sld [smem:[#allocation0]]
  $region65: #{sepconv_forward.1} parent=0
    _
  %s9 = ssub.s32 1, %s7
  %s10 = scalar_select 0, %s9, %s7
  $region1: #{sepconv_forward.1} parent=0
    #allocation4 [shape = 'u8[802816]{0}', space=vmem, size = 0xc4000, scoped, tag = 'input window, operand 3, single buffered']
    #allocation5 [shape = 's32[2]{0}', space=sflag, size = 0x8, scoped, tag = 'scoped memory for sepconv_forward.1']
    %11 = vsyncpa [#allocation5], 0
    loop: start=0, step=1, limit=10
    $region2: #{sepconv_forward.1} parent=1 // loop_pre_header
      _
    $region3: #{sepconv_forward.1} parent=1 // loop_header
      %s13 = sphi 0, %s17
      %p14 = scmp.ge.s32.totalorder %s13, 10
      %s20 = sphi 0, %s32
      %s21 = sphi 0, %s28
      %s22 = sphi 0, %s20
      %s23 = sphi 0, %s21
      %s24 = sphi 0, %s22
      %s25 = sphi 0, %s23
      %s37 = sphi 0, %s39
      %s40 = sphi 0, %s37
      %s41 = sphi 0, %s40
      %s57 = sphi 0, %s41
      %s61 = sphi 0, %s61
      %s63 = sphi 0, %s61
      %s64 = sphi 0, %s63
      %s78 = sphi 0, %s64
      %s82 = sphi 0, %s82
      %s84 = sphi 0, %s82
      %s85 = sphi 0, %s84
      %s99 = sphi 0, %s85
      %s103 = sphi 0, %s103
      %s105 = sphi 0, %s103
      %s106 = sphi 0, %s105
      %s120 = sphi 0, %s106
      %s124 = sphi 0, %s124
      %s126 = sphi 0, %s124
      %s127 = sphi 0, %s126
      %s141 = sphi 0, %s127
      %s145 = sphi 0, %s145
      %s147 = sphi 0, %s145
      %s148 = sphi 0, %s147
      %s162 = sphi 0, %s148
      %s170 = sphi 0, %s172
      %s173 = sphi 0, %s170
      %s174 = sphi 0, %s173
      %s190 = sphi 0, %s174
    $region4: #{sepconv_forward.1} parent=1 // loop_header_branch
      %16 = sbr.rel (%p14) target = $region8
    $region5: #{sepconv_forward.1} parent=1 // loop_body
      %s18 = ssub.s32 %s13, 1
      %s19 = ssub.s32 %s13, 2
      %s26 = sadd.s32 1, %s21
      %p27 = scmp.ge.s32.totalorder %s26, 4
      %s28 = scalar_select %p27, 0, %s26
      %s29 = sadd.s32 1, %s20
      %s30 = scalar_select %p27, %s29, %s20
      %p31 = scmp.ge.s32.totalorder %s30, 2
      %s32 = scalar_select %p31, 0, %s30
      %s33 = ssub.s32 %s21, %s28
      %s34 = ssub.s32 %s20, %s32
      %s35 = sor.u32 %s33, %s34
      %p36 = scmp.eq.s32.totalorder %s35, 0
      %s38 = sadd.s32 %s37, 1
      %s39 = scalar_select %p36, %s37, %s38
      %p42 = pneg %p36
      %p43 = scmp.eq.s32.totalorder %s13, 7
      %p44 = por %p42, %p43
      %p45 = scmp.ne.s32.totalorder %s37, %s40
      %p46 = scmp.eq.s32.totalorder %s13, 0
      %p47 = por %p45, %p46
      %p48 = scmp.ne.s32.totalorder %s37, %s40
      %p49 = scmp.eq.s32.totalorder %s18, 7
      %p50 = por %p48, %p49
      %p51 = scmp.ne.s32.totalorder %s40, %s41
      %p52 = scmp.eq.s32.totalorder %s18, 0
      %p53 = por %p51, %p52
      %p54 = scmp.ne.s32.totalorder %s40, %s41
      %p55 = scmp.eq.s32.totalorder %s19, 7
      %p56 = por %p54, %p55
      %p58 = scmp.ne.s32.totalorder %s41, %s57
      %p59 = scmp.eq.s32.totalorder %s19, 0
      %p60 = por %p58, %p59
      %s62 = sadd.s32 %s61, 1
      %p65 = scmp.eq.s32.totalorder %s13, 7
      %p66 = scmp.ne.s32.totalorder %s61, %s63
      %p67 = scmp.eq.s32.totalorder %s13, 0
      %p68 = por %p66, %p67
      %p69 = scmp.ne.s32.totalorder %s61, %s63
      %p70 = scmp.eq.s32.totalorder %s18, 7
      %p71 = por %p69, %p70
      %p72 = scmp.ne.s32.totalorder %s63, %s64
      %p73 = scmp.eq.s32.totalorder %s18, 0
      %p74 = por %p72, %p73
      %p75 = scmp.ne.s32.totalorder %s63, %s64
      %p76 = scmp.eq.s32.totalorder %s19, 7
      %p77 = por %p75, %p76
      %p79 = scmp.ne.s32.totalorder %s64, %s78
      %p80 = scmp.eq.s32.totalorder %s19, 0
      %p81 = por %p79, %p80
      %s83 = sadd.s32 %s82, 1
      %p86 = scmp.eq.s32.totalorder %s13, 7
      %p87 = scmp.ne.s32.totalorder %s82, %s84
      %p88 = scmp.eq.s32.totalorder %s13, 0
      %p89 = por %p87, %p88
      %p90 = scmp.ne.s32.totalorder %s82, %s84
      %p91 = scmp.eq.s32.totalorder %s18, 7
      %p92 = por %p90, %p91
      %p93 = scmp.ne.s32.totalorder %s84, %s85
      %p94 = scmp.eq.s32.totalorder %s18, 0
      %p95 = por %p93, %p94
      %p96 = scmp.ne.s32.totalorder %s84, %s85
      %p97 = scmp.eq.s32.totalorder %s19, 7
      %p98 = por %p96, %p97
      %p100 = scmp.ne.s32.totalorder %s85, %s99
      %p101 = scmp.eq.s32.totalorder %s19, 0
      %p102 = por %p100, %p101
      %s104 = sadd.s32 %s103, 1
      %p107 = scmp.eq.s32.totalorder %s13, 7
      %p108 = scmp.ne.s32.totalorder %s103, %s105
      %p109 = scmp.eq.s32.totalorder %s13, 0
      %p110 = por %p108, %p109
      %p111 = scmp.ne.s32.totalorder %s103, %s105
      %p112 = scmp.eq.s32.totalorder %s18, 7
      %p113 = por %p111, %p112
      %p114 = scmp.ne.s32.totalorder %s105, %s106
      %p115 = scmp.eq.s32.totalorder %s18, 0
      %p116 = por %p114, %p115
      %p117 = scmp.ne.s32.totalorder %s105, %s106
      %p118 = scmp.eq.s32.totalorder %s19, 7
      %p119 = por %p117, %p118
      %p121 = scmp.ne.s32.totalorder %s106, %s120
      %p122 = scmp.eq.s32.totalorder %s19, 0
      %p123 = por %p121, %p122
      %s125 = sadd.s32 %s124, 1
      %p128 = scmp.eq.s32.totalorder %s13, 7
      %p129 = scmp.ne.s32.totalorder %s124, %s126
      %p130 = scmp.eq.s32.totalorder %s13, 0
      %p131 = por %p129, %p130
      %p132 = scmp.ne.s32.totalorder %s124, %s126
      %p133 = scmp.eq.s32.totalorder %s18, 7
      %p134 = por %p132, %p133
      %p135 = scmp.ne.s32.totalorder %s126, %s127
      %p136 = scmp.eq.s32.totalorder %s18, 0
      %p137 = por %p135, %p136
      %p138 = scmp.ne.s32.totalorder %s126, %s127
      %p139 = scmp.eq.s32.totalorder %s19, 7
      %p140 = por %p138, %p139
      %p142 = scmp.ne.s32.totalorder %s127, %s141
      %p143 = scmp.eq.s32.totalorder %s19, 0
      %p144 = por %p142, %p143
      %s146 = sadd.s32 %s145, 1
      %p149 = scmp.eq.s32.totalorder %s13, 7
      %p150 = scmp.ne.s32.totalorder %s145, %s147
      %p151 = scmp.eq.s32.totalorder %s13, 0
      %p152 = por %p150, %p151
      %p153 = scmp.ne.s32.totalorder %s145, %s147
      %p154 = scmp.eq.s32.totalorder %s18, 7
      %p155 = por %p153, %p154
      %p156 = scmp.ne.s32.totalorder %s147, %s148
      %p157 = scmp.eq.s32.totalorder %s18, 0
      %p158 = por %p156, %p157
      %p159 = scmp.ne.s32.totalorder %s147, %s148
      %p160 = scmp.eq.s32.totalorder %s19, 7
      %p161 = por %p159, %p160
      %p163 = scmp.ne.s32.totalorder %s148, %s162
      %p164 = scmp.eq.s32.totalorder %s19, 0
      %p165 = por %p163, %p164
      %s166 = ssub.s32 %s21, %s28
      %s167 = ssub.s32 %s20, %s32
      %s168 = sor.u32 %s166, %s167
      %p169 = scmp.eq.s32.totalorder %s168, 0
      %s171 = sadd.s32 %s170, 1
      %s172 = scalar_select %p169, %s170, %s171
      %p175 = pneg %p169
      %p176 = scmp.eq.s32.totalorder %s13, 7
      %p177 = por %p175, %p176
      %p178 = scmp.ne.s32.totalorder %s170, %s173
      %p179 = scmp.eq.s32.totalorder %s13, 0
      %p180 = por %p178, %p179
      %p181 = scmp.ne.s32.totalorder %s170, %s173
      %p182 = scmp.eq.s32.totalorder %s18, 7
      %p183 = por %p181, %p182
      %p184 = scmp.ne.s32.totalorder %s173, %s174
      %p185 = scmp.eq.s32.totalorder %s18, 0
      %p186 = por %p184, %p185
      %p187 = scmp.ne.s32.totalorder %s173, %s174
      %p188 = scmp.eq.s32.totalorder %s19, 7
      %p189 = por %p187, %p188
      %p191 = scmp.ne.s32.totalorder %s174, %s190
      %p192 = scmp.eq.s32.totalorder %s19, 0
      %p193 = por %p191, %p192
      %p194 = scmp.le.s32.totalorder 1, %s13
      %p195 = scmp.lt.s32.totalorder %s13, 9
      %p196 = pnand %p194, %p195
      %p197 = pneg %p196
      // Predicated region
      $region9: #{sepconv_forward.1} parent=5 // pred_check
        _
      $region10: #{sepconv_forward.1} parent=5 // pred_check_branch
        %199 = sbr.rel (%p196) target = $region12
      $region11: #{sepconv_forward.1} parent=5 // pred_region
        %s200 = ssub.s32 %s13, 1
        // Predicated region
        $region13: #{sepconv_forward.1} parent=11 // pred_check
          %p201 = pneg %p74
        $region14: #{sepconv_forward.1} parent=11 // pred_check_branch
          %203 = sbr.rel (%p201) target = $region16
        $region15: #{sepconv_forward.1} parent=11 // pred_region
          _
        $region16: #{sepconv_forward.1} parent=11 // pred_fallthru
          _
        // Predicated region
        $region17: #{sepconv_forward.1} parent=11 // pred_check
          %p204 = pneg %p95
        $region18: #{sepconv_forward.1} parent=11 // pred_check_branch
          %206 = sbr.rel (%p204) target = $region20
        $region19: #{sepconv_forward.1} parent=11 // pred_region
          _
        $region20: #{sepconv_forward.1} parent=11 // pred_fallthru
          _
        // Predicated region
        $region21: #{sepconv_forward.1} parent=11 // pred_check
          %p207 = pneg %p116
        $region22: #{sepconv_forward.1} parent=11 // pred_check_branch
          %209 = sbr.rel (%p207) target = $region24
        $region23: #{sepconv_forward.1} parent=11 // pred_region
          %s211 = ssub.s32 25088, 25088
          %212 = vsyncadd [#allocation5], %s211
          %s213 = sshll.u32 [#allocation4], 4
          %s214 = int_to_ptr.vmem [resolvable:$true] %s213
          %219 = dma.hbm_to_vmem [thread:$0]  %s3, 25088, %s214, [#allocation5], 256, 256, 16
        $region24: #{sepconv_forward.1} parent=11 // pred_fallthru
          _
        // Predicated region
        $region25: #{sepconv_forward.1} parent=11 // pred_check
          %p220 = pneg %p137
        $region26: #{sepconv_forward.1} parent=11 // pred_check_branch
          %222 = sbr.rel (%p220) target = $region28
        $region27: #{sepconv_forward.1} parent=11 // pred_region
          _
        $region28: #{sepconv_forward.1} parent=11 // pred_fallthru
          _
        // Predicated region
        $region29: #{sepconv_forward.1} parent=11 // pred_check
          %p223 = pneg %p158
        $region30: #{sepconv_forward.1} parent=11 // pred_check_branch
          %225 = sbr.rel (%p223) target = $region32
        $region31: #{sepconv_forward.1} parent=11 // pred_region
          _
        $region32: #{sepconv_forward.1} parent=11 // pred_fallthru
          _
      $region12: #{sepconv_forward.1} parent=5 // pred_fallthru
        _
      %p226 = scmp.lt.s32.totalorder %s13, 8
      // Predicated region
      $region33: #{sepconv_forward.1} parent=5 // pred_check
        %p227 = pneg %p226
      $region34: #{sepconv_forward.1} parent=5 // pred_check_branch
        %229 = sbr.rel (%p227) target = $region36
      $region35: #{sepconv_forward.1} parent=5 // pred_region
        // Predicated region
        $region37: #{sepconv_forward.1} parent=35 // pred_check
          %p230 = pneg %p47
        $region38: #{sepconv_forward.1} parent=35 // pred_check_branch
          %232 = sbr.rel (%p230) target = $region40
        $region39: #{sepconv_forward.1} parent=35 // pred_region
          %p233 = scmp.lt.s32.totalorder %s21, 3
          %s234 = scalar_select %p233, %s21, 3
          %p235 = scmp.lt.s32.totalorder %s20, 1
          %s236 = scalar_select %p235, %s20, 1
          %s237 = smul.addr %s236, 2
          %s238 = smul.addr %s234, 4
          %s239 = sadd.s32 %s237, %s238
          %s240 = smul.addr %s239, 8
          %s241 = scalar_lea.vmem %s0, %s240
        $region40: #{sepconv_forward.1} parent=35 // pred_fallthru
          _
      $region36: #{sepconv_forward.1} parent=5 // pred_fallthru
        _
      %p242 = scmp.le.s32.totalorder 1, %s13
      %p243 = scmp.lt.s32.totalorder %s13, 9
      %p244 = pnand %p242, %p243
      %p245 = pneg %p244
      // Predicated region
      $region41: #{sepconv_forward.1} parent=5 // pred_check
        _
      $region42: #{sepconv_forward.1} parent=5 // pred_check_branch
        %247 = sbr.rel (%p244) target = $region44
      $region43: #{sepconv_forward.1} parent=5 // pred_region
        %s248 = ssub.s32 %s13, 1
        // Predicated region
        $region45: #{sepconv_forward.1} parent=43 // pred_check
          %p249 = pneg %p116
        $region46: #{sepconv_forward.1} parent=43 // pred_check_branch
          %251 = sbr.rel (%p249) target = $region48
        $region47: #{sepconv_forward.1} parent=43 // pred_region
          %252 = dma.done [#allocation5], 25088
        $region48: #{sepconv_forward.1} parent=43 // pred_fallthru
          _
        %p253 = scmp.lt.s32.totalorder %s23, 3
        %s254 = scalar_select %p253, %s23, 3
        %p255 = scmp.lt.s32.totalorder %s22, 1
        %s256 = scalar_select %p255, %s22, 1
        %s257 = smul.addr %s256, 2
        %s258 = smul.addr %s254, 4
        %s259 = sadd.s32 %s257, %s258
        %s260 = smul.addr %s259, 8
        %s261 = scalar_lea.vmem %s0, %s260
        %p262 = pneg %p53
        %p263 = pneg %p50
        %p264 = pneg %p74
        %p265 = pneg %p71
        %p266 = pneg %p95
        %p267 = pneg %p92
        %p268 = pneg %p116
        %p269 = pneg %p113
        %p270 = pneg %p137
        %p271 = pneg %p134
        %p272 = pneg %p158
        %p273 = pneg %p155
        %p274 = pneg %p186
        %p275 = pneg %p183
        %p276 = scmp.lt.s32.totalorder %s23, 3
        %s277 = scalar_select %p276, %s23, 3
        %p278 = scmp.lt.s32.totalorder %s22, 1
        %s279 = scalar_select %p278, %s22, 1
        %s280 = smul.addr %s279, 2
        %s281 = smul.addr %s277, 4
        %s282 = sadd.s32 %s280, %s281
        %s283 = smul.addr %s282, 8
        %s284 = scalar_lea.vmem %s6, %s283
        %p285 = scmp.lt.s32.totalorder %s23, 3
        %s286 = scalar_select %p285, %s23, 3
        %p287 = scmp.lt.s32.totalorder %s22, 1
        %s288 = scalar_select %p287, %s22, 1
        %s289 = smul.addr %s288, 2
        %s290 = smul.addr %s286, 4
        %s291 = sadd.s32 %s289, %s290
        %s292 = smul.addr %s291, 8
        %s293 = scalar_lea.vmem %s0, %s292
        %p294 = scmp.lt.s32.totalorder %s23, 3
        %s295 = scalar_select %p294, %s23, 3
        %p296 = scmp.lt.s32.totalorder %s22, 1
        %s297 = scalar_select %p296, %s22, 1
        %s298 = smul.addr %s297, 2
        %s299 = smul.addr %s295, 4
        %s300 = sadd.s32 %s298, %s299
        %s301 = smul.addr %s300, 8
        %s302 = scalar_lea.vmem %s6, %s301
        %p303 = scmp.eq.s32.totalorder %s23, 0
        // Predicated region
        $region49: #{sepconv_forward.1} parent=43 // pred_check
          %p304 = pneg %p303
        $region50: #{sepconv_forward.1} parent=43 // pred_check_branch
          %306 = sbr.rel (%p304) target = $region52
        $region51: #{sepconv_forward.1} parent=43 // pred_region
          %307 = vst [vmem:[#allocation2] sm:$0xff] 0.0
          %308 = vst [vmem:[#allocation2 + $0x8] sm:$0xff] 0.0
          %309 = vst [vmem:[#allocation3] sm:$0xff] 0.0
          %310 = vst [vmem:[#allocation3 + $0x8] sm:$0xff] 0.0
          %311 = vst [vmem:[#allocation3 + $0x10] sm:$0xff] 0.0
          %312 = vst [vmem:[#allocation3 + $0x18] sm:$0xff] 0.0
        $region52: #{sepconv_forward.1} parent=43 // pred_fallthru
          _
        %v313 = vld [vmem:[%s293] sm:$0xff]
        %v314 = vld [vmem:[%s293 + $0x8] sm:$0xff]
        %v315 = vld [vmem:[#allocation2] sm:$0xff]
        %v316 = vld [vmem:[#allocation2 + $0x8] sm:$0xff]
        %v317 = vsub.f32 %v313, %v315
        %v318 = vsub.f32 %v314, %v316
        %v319 = vmul.f32 %v317, 0.5
        %v320 = vmul.f32 %v318, 0.5
        %v321 = vadd.f32 %v315, %v319
        %v322 = vadd.f32 %v316, %v320
        %vm323 = vcmp.ge.f32.partialorder %v321, 1.0
        %vm324 = vcmp.ge.f32.partialorder %v322, 1.0
        %v325 = vsel %vm323, 1, 0
        %v326 = vsel %vm324, 1, 0
        %v327 = vcvt.s32.f32 %v325
        %v328 = vcvt.s32.f32 %v326
        %v329 = vsub.f32 1.0, %v327
        %v330 = vsub.f32 1.0, %v328
        %v331 = vmul.f32 %v321, %v329
        %v332 = vmul.f32 %v322, %v330
        %333 = vst [vmem:[#allocation2] sm:$0xff] %v331
        %334 = vst [vmem:[#allocation2 + $0x8] sm:$0xff] %v332
        %v335 = vld [vmem:[%s1] sm:$0xff]
        %v336 = vld [vmem:[%s1 + $0x8] sm:$0xff]
        %v337 = vld [vmem:[%s2] sm:$0xff]
        %v338 = vld [vmem:[%s2 + $0x8] sm:$0xff]
        %v339 = vld [vmem:[%s4] sm:$0xff]
        %v340 = vld [vmem:[%s5] sm:$0xff]
        %342 = vset.pattern.permute.xlu0 0
        %343 = vperm.xlu0 %342, %v337
        %v344 = vpop.permute.xlu0 %343
        %347 = vset.pattern.permute.xlu0 0
        %348 = vperm.xlu0 %347, %v338
        %v349 = vpop.permute.xlu0 %348
        %vm351 = vcmask 64512
        %v353 = vsel %vm351, %v335, 0
        %v356 = vsel %vm351, %v336, 0
        %358 = vmatprep.subr.mxu0 %v328
        %359 = vmatpush1.msra.mxu0 %v327
        %360 = vmatprep.subr.mxu0 0.0
        %361 = vmatpush1.msra.mxu0 0.0
        %362 = vmatprep.subr.mxu0 0.0
        %363 = vmatpush1.msra.mxu0 0.0
        %364 = vmatprep.subr.mxu0 0.0
        %365 = vmatpush1.msra.mxu0 0.0
        %366 = vmatprep.subr.mxu0 0.0
        %367 = vmatpush1.msra.mxu0 0.0
        %368 = vmatprep.subr.mxu0 0.0
        %369 = vmatpush1.msra.mxu0 0.0
        %370 = vmatprep.subr.mxu0 0.0
        %371 = vmatpush1.msra.mxu0 0.0
        %372 = vmatprep.subr.mxu0 0.0
        %373 = vmatpush1.msra.mxu0 0.0
        %374 = vmatprep.subr.mxu0 0.0
        %375 = vmatpush1.msra.mxu0 0.0
        %376 = vmatprep.subr.mxu0 0.0
        %377 = vmatpush1.msra.mxu0 0.0
        %378 = vmatprep.subr.mxu0 0.0
        %379 = vmatpush1.msra.mxu0 0.0
        %380 = vmatprep.subr.mxu0 0.0
        %381 = vmatpush1.msra.mxu0 0.0
        %382 = vmatprep.subr.mxu0 0.0
        %383 = vmatpush1.msra.mxu0 0.0
        %384 = vmatprep.subr.mxu0 0.0
        %385 = vmatpush1.msra.mxu0 0.0
        %386 = vmatprep.subr.mxu0 0.0
        %387 = vmatpush1.msra.mxu0 0.0
        %388 = vmatprep.subr.mxu0 0.0
        %389 = vmatpush1.msra.mxu0 0.0
        %390 = vmatprep.subr.mxu0 0.0
        %391 = vmatpush1.msra.mxu0 0.0
        %392 = vmatprep.subr.mxu0 0.0
        %393 = vmatpush1.msra.mxu0 0.0
        %394 = vmatprep.subr.mxu0 0.0
        %395 = vmatpush1.msra.mxu0 0.0
        %396 = vmatprep.subr.mxu0 0.0
        %397 = vmatpush1.msra.mxu0 0.0
        %398 = vmatprep.subr.mxu0 0.0
        %399 = vmatpush1.msra.mxu0 0.0
        %400 = vmatprep.subr.mxu0 0.0
        %401 = vmatpush1.msra.mxu0 0.0
        %402 = vmatprep.subr.mxu0 0.0
        %403 = vmatpush1.msra.mxu0 0.0
        %404 = vmatprep.subr.mxu0 0.0
        %405 = vmatpush1.msra.mxu0 0.0
        %406 = vmatprep.subr.mxu0 0.0
        %407 = vmatpush1.msra.mxu0 0.0
        %408 = vmatprep.subr.mxu0 0.0
        %409 = vmatpush1.msra.mxu0 0.0
        %410 = vmatprep.subr.mxu0 0.0
        %411 = vmatpush1.msra.mxu0 0.0
        %412 = vmatprep.subr.mxu0 0.0
        %413 = vmatpush1.msra.mxu0 0.0
        %414 = vmatprep.subr.mxu0 0.0
        %415 = vmatpush1.msra.mxu0 0.0
        %416 = vmatprep.subr.mxu0 0.0
        %417 = vmatpush1.msra.mxu0 0.0
        %418 = vmatprep.subr.mxu0 0.0
        %419 = vmatpush1.msra.mxu0 0.0
        %420 = vmatprep.subr.mxu0 0.0
        %421 = vmatpush1.msra.mxu0 0.0
        %422 = vmatprep.mubr.f32.mxu0 0.0
        %423 = vmatmul.mubr.f32.gmra.mrb[0].mxu0 %v353
        %v424 = vpop.f32.mrb[0].mxu0
        %v425 = vadd.f32 %v344, %v424
        %v426 = vpop.f32.mrb[0].mxu0
        %v427 = vadd.f32 %v344, %v426
        %428 = vmatprep.mubr.f32.mxu0 0.0
        %429 = vmatmul.mubr.f32.gmra.mrb[0].mxu0 %v356
        %v430 = vpop.f32.mrb[0].mxu0
        %v431 = vadd.f32 %v349, %v430
        %v432 = vpop.f32.mrb[0].mxu0
        %v433 = vadd.f32 %v349, %v432
        %434 = vdwg.mxu0
        %v435 = vld [vmem:[#allocation3] sm:$0xff]
        %v436 = vld [vmem:[#allocation3 + $0x8] sm:$0xff]
        %v437 = vld [vmem:[#allocation3 + $0x10] sm:$0xff]
        %v438 = vld [vmem:[#allocation3 + $0x18] sm:$0xff]
        %v439 = vsub.f32 %v425, %v435
        %v440 = vsub.f32 %v427, %v436
        %v441 = vsub.f32 %v431, %v437
        %v442 = vsub.f32 %v433, %v438
        %v443 = vmul.f32 %v439, 0.5
        %v444 = vmul.f32 %v440, 0.5
        %v445 = vmul.f32 %v441, 0.5
        %v446 = vmul.f32 %v442, 0.5
        %v447 = vadd.f32 %v435, %v443
        %v448 = vadd.f32 %v436, %v444
        %v449 = vadd.f32 %v437, %v445
        %v450 = vadd.f32 %v438, %v446
        %vm451 = vcmp.ge.f32.partialorder %v447, 1.0
        %vm452 = vcmp.ge.f32.partialorder %v448, 1.0
        %vm453 = vcmp.ge.f32.partialorder %v449, 1.0
        %vm454 = vcmp.ge.f32.partialorder %v450, 1.0
        %v455 = vsel %vm451, 1, 0
        %v456 = vsel %vm452, 1, 0
        %v457 = vsel %vm453, 1, 0
        %v458 = vsel %vm454, 1, 0
        %v459 = vcvt.s32.f32 %v455
        %v460 = vcvt.s32.f32 %v456
        %v461 = vcvt.s32.f32 %v457
        %v462 = vcvt.s32.f32 %v458
        %v463 = vsub.f32 1.0, %v459
        %v464 = vsub.f32 1.0, %v460
        %v465 = vsub.f32 1.0, %v461
        %v466 = vsub.f32 1.0, %v462
        %v467 = vmul.f32 %v447, %v463
        %v468 = vmul.f32 %v448, %v464
        %v469 = vmul.f32 %v449, %v465
        %v470 = vmul.f32 %v450, %v466
        %471 = vst [vmem:[#allocation3] sm:$0xff] %v467
        %472 = vst [vmem:[#allocation3 + $0x8] sm:$0xff] %v468
        %473 = vst [vmem:[#allocation3 + $0x10] sm:$0xff] %v469
        %474 = vst [vmem:[#allocation3 + $0x18] sm:$0xff] %v470
        %475 = vrot.lane.b32.xlu0 %v459, 51
        %v476 = vpop.permute.xlu0 %475
        %477 = vrot.lane.b32.xlu0 %v461, 51
        %v478 = vpop.permute.xlu0 %477
        %479 = vrot.lane.b32.xlu0 %v460, 51
        %v480 = vpop.permute.xlu0 %479
        %481 = vrot.lane.b32.xlu0 %v462, 51
        %v482 = vpop.permute.xlu0 %481
        %v483 = vlaneseq
        %v484 = vand.u32 %v483, 127
        %vm485 = vcmp.lt.s32.totalorder %v484, 51
        %v486 = vsel %vm485, %v476, %v480
        %v487 = vsel %vm485, %v478, %v482
        %v488 = vsel %vm485, %v480, %v476
        %v489 = vsel %vm485, %v482, %v478
        %v490 = vld [vmem:[#allocation4] sm:$0xff]
        %v491 = vld [vmem:[#allocation4 + $0x8] sm:$0xff]
        %v492 = vld [vmem:[#allocation4 + $0x10] sm:$0xff]
        %v493 = vld [vmem:[#allocation4 + $0x18] sm:$0xff]
        %v494 = vmul.f32 %v488, %v490
        %v495 = vmul.f32 %v486, %v491
        %v496 = vmul.f32 %v489, %v492
        %v497 = vmul.f32 %v487, %v493
        %498 = vrot.lane.b32.xlu0 %v459, 50
        %v499 = vpop.permute.xlu0 %498
        %500 = vrot.lane.b32.xlu0 %v461, 50
        %v501 = vpop.permute.xlu0 %500
        %502 = vrot.lane.b32.xlu0 %v460, 50
        %v503 = vpop.permute.xlu0 %502
        %504 = vrot.lane.b32.xlu0 %v462, 50
        %v505 = vpop.permute.xlu0 %504
        %vm506 = vcmp.lt.s32.totalorder %v484, 50
        %v507 = vsel %vm506, %v499, %v503
        %v508 = vsel %vm506, %v501, %v505
        %v509 = vsel %vm506, %v503, %v499
        %v510 = vsel %vm506, %v505, %v501
        %s511 = scalar_lea.vmem [#allocation4], 32
        %v512 = vld [vmem:[%s511] sm:$0xff]
        %v513 = vld [vmem:[%s511 + $0x8] sm:$0xff]
        %v514 = vld [vmem:[%s511 + $0x10] sm:$0xff]
        %v515 = vld [vmem:[%s511 + $0x18] sm:$0xff]
        %v516 = vmul.f32 %v509, %v512
        %v517 = vmul.f32 %v507, %v513
        %v518 = vmul.f32 %v510, %v514
        %v519 = vmul.f32 %v508, %v515
        %v520 = vadd.f32 %v494, %v516
        %v521 = vadd.f32 %v495, %v517
        %v522 = vadd.f32 %v496, %v518
        %v523 = vadd.f32 %v497, %v519
        %524 = vrot.lane.b32.xlu0 %v459, 49
        %v525 = vpop.permute.xlu0 %524
        %526 = vrot.lane.b32.xlu0 %v461, 49
        %v527 = vpop.permute.xlu0 %526
        %528 = vrot.lane.b32.xlu0 %v460, 49
        %v529 = vpop.permute.xlu0 %528
        %530 = vrot.lane.b32.xlu0 %v462, 49
        %v531 = vpop.permute.xlu0 %530
        %vm532 = vcmp.lt.s32.totalorder %v484, 49
        %v533 = vsel %vm532, %v525, %v529
        %v534 = vsel %vm532, %v527, %v531
        %v535 = vsel %vm532, %v529, %v525
        %v536 = vsel %vm532, %v531, %v527
        %s537 = scalar_lea.vmem [#allocation4], 64
        %v538 = vld [vmem:[%s537] sm:$0xff]
        %v539 = vld [vmem:[%s537 + $0x8] sm:$0xff]
        %v540 = vld [vmem:[%s537 + $0x10] sm:$0xff]
        %v541 = vld [vmem:[%s537 + $0x18] sm:$0xff]
        %v542 = vmul.f32 %v535, %v538
        %v543 = vmul.f32 %v533, %v539
        %v544 = vmul.f32 %v536, %v540
        %v545 = vmul.f32 %v534, %v541
        %v546 = vadd.f32 %v520, %v542
        %v547 = vadd.f32 %v521, %v543
        %v548 = vadd.f32 %v522, %v544
        %v549 = vadd.f32 %v523, %v545
        %550 = vrot.lane.b32.xlu0 %v459, 48
        %v551 = vpop.permute.xlu0 %550
        %552 = vrot.lane.b32.xlu0 %v461, 48
        %v553 = vpop.permute.xlu0 %552
        %554 = vrot.lane.b32.xlu0 %v460, 48
        %v555 = vpop.permute.xlu0 %554
        %556 = vrot.lane.b32.xlu0 %v462, 48
        %v557 = vpop.permute.xlu0 %556
        %vm558 = vcmp.lt.s32.totalorder %v484, 48
        %v559 = vsel %vm558, %v551, %v555
        %v560 = vsel %vm558, %v553, %v557
        %v561 = vsel %vm558, %v555, %v551
        %v562 = vsel %vm558, %v557, %v553
        %s563 = scalar_lea.vmem [#allocation4], 96
        %v564 = vld [vmem:[%s563] sm:$0xff]
        %v565 = vld [vmem:[%s563 + $0x8] sm:$0xff]
        %v566 = vld [vmem:[%s563 + $0x10] sm:$0xff]
        %v567 = vld [vmem:[%s563 + $0x18] sm:$0xff]
        %v568 = vmul.f32 %v561, %v564
        %v569 = vmul.f32 %v559, %v565
        %v570 = vmul.f32 %v562, %v566
        %v571 = vmul.f32 %v560, %v567
        %v572 = vadd.f32 %v546, %v568
        %v573 = vadd.f32 %v547, %v569
        %v574 = vadd.f32 %v548, %v570
        %v575 = vadd.f32 %v549, %v571
        %576 = vrot.lane.b32.xlu0 %v459, 47
        %v577 = vpop.permute.xlu0 %576
        %578 = vrot.lane.b32.xlu0 %v461, 47
        %v579 = vpop.permute.xlu0 %578
        %580 = vrot.lane.b32.xlu0 %v460, 47
        %v581 = vpop.permute.xlu0 %580
        %582 = vrot.lane.b32.xlu0 %v462, 47
        %v583 = vpop.permute.xlu0 %582
        %vm584 = vcmp.lt.s32.totalorder %v484, 47
        %v585 = vsel %vm584, %v577, %v581
        %v586 = vsel %vm584, %v579, %v583
        %v587 = vsel %vm584, %v581, %v577
        %v588 = vsel %vm584, %v583, %v579
        %s589 = scalar_lea.vmem [#allocation4], 128
        %v590 = vld [vmem:[%s589] sm:$0xff]
        %v591 = vld [vmem:[%s589 + $0x8] sm:$0xff]
        %v592 = vld [vmem:[%s589 + $0x10] sm:$0xff]
        %v593 = vld [vmem:[%s589 + $0x18] sm:$0xff]
        %v594 = vmul.f32 %v587, %v590
        %v595 = vmul.f32 %v585, %v591
        %v596 = vmul.f32 %v588, %v592
        %v597 = vmul.f32 %v586, %v593
        %v598 = vadd.f32 %v572, %v594
        %v599 = vadd.f32 %v573, %v595
        %v600 = vadd.f32 %v574, %v596
        %v601 = vadd.f32 %v575, %v597
        %602 = vrot.lane.b32.xlu0 %v459, 46
        %v603 = vpop.permute.xlu0 %602
        %604 = vrot.lane.b32.xlu0 %v461, 46
        %v605 = vpop.permute.xlu0 %604
        %606 = vrot.lane.b32.xlu0 %v460, 46
        %v607 = vpop.permute.xlu0 %606
        %608 = vrot.lane.b32.xlu0 %v462, 46
        %v609 = vpop.permute.xlu0 %608
        %vm610 = vcmp.lt.s32.totalorder %v484, 46
        %v611 = vsel %vm610, %v603, %v607
        %v612 = vsel %vm610, %v605, %v609
        %v613 = vsel %vm610, %v607, %v603
        %v614 = vsel %vm610, %v609, %v605
        %s615 = scalar_lea.vmem [#allocation4], 160
        %v616 = vld [vmem:[%s615] sm:$0xff]
        %v617 = vld [vmem:[%s615 + $0x8] sm:$0xff]
        %v618 = vld [vmem:[%s615 + $0x10] sm:$0xff]
        %v619 = vld [vmem:[%s615 + $0x18] sm:$0xff]
        %v620 = vmul.f32 %v613, %v616
        %v621 = vmul.f32 %v611, %v617
        %v622 = vmul.f32 %v614, %v618
        %v623 = vmul.f32 %v612, %v619
        %v624 = vadd.f32 %v598, %v620
        %v625 = vadd.f32 %v599, %v621
        %v626 = vadd.f32 %v600, %v622
        %v627 = vadd.f32 %v601, %v623
        %628 = vrot.lane.b32.xlu0 %v459, 45
        %v629 = vpop.permute.xlu0 %628
        %630 = vrot.lane.b32.xlu0 %v461, 45
        %v631 = vpop.permute.xlu0 %630
        %632 = vrot.lane.b32.xlu0 %v460, 45
        %v633 = vpop.permute.xlu0 %632
        %634 = vrot.lane.b32.xlu0 %v462, 45
        %v635 = vpop.permute.xlu0 %634
        %vm636 = vcmp.lt.s32.totalorder %v484, 45
        %v637 = vsel %vm636, %v629, %v633
        %v638 = vsel %vm636, %v631, %v635
        %v639 = vsel %vm636, %v633, %v629
        %v640 = vsel %vm636, %v635, %v631
        %s641 = scalar_lea.vmem [#allocation4], 192
        %v642 = vld [vmem:[%s641] sm:$0xff]
        %v643 = vld [vmem:[%s641 + $0x8] sm:$0xff]
        %v644 = vld [vmem:[%s641 + $0x10] sm:$0xff]
        %v645 = vld [vmem:[%s641 + $0x18] sm:$0xff]
        %v646 = vmul.f32 %v639, %v642
        %v647 = vmul.f32 %v637, %v643
        %v648 = vmul.f32 %v640, %v644
        %v649 = vmul.f32 %v638, %v645
        %v650 = vadd.f32 %v624, %v646
        %v651 = vadd.f32 %v625, %v647
        %v652 = vadd.f32 %v626, %v648
        %v653 = vadd.f32 %v627, %v649
        %654 = vrot.lane.b32.xlu0 %v459, 35
        %v655 = vpop.permute.xlu0 %654
        %656 = vrot.lane.b32.xlu0 %v461, 35
        %v657 = vpop.permute.xlu0 %656
        %658 = vrot.lane.b32.xlu0 %v460, 35
        %v659 = vpop.permute.xlu0 %658
        %660 = vrot.lane.b32.xlu0 %v462, 35
        %v661 = vpop.permute.xlu0 %660
        %vm662 = vcmp.lt.s32.totalorder %v484, 35
        %v663 = vsel %vm662, %v655, %v659
        %v664 = vsel %vm662, %v657, %v661
        %v665 = vsel %vm662, %v659, %v655
        %v666 = vsel %vm662, %v661, %v657
        %s667 = scalar_lea.vmem [#allocation4], 224
        %v668 = vld [vmem:[%s667] sm:$0xff]
        %v669 = vld [vmem:[%s667 + $0x8] sm:$0xff]
        %v670 = vld [vmem:[%s667 + $0x10] sm:$0xff]
        %v671 = vld [vmem:[%s667 + $0x18] sm:$0xff]
        %v672 = vmul.f32 %v665, %v668
        %v673 = vmul.f32 %v663, %v669
        %v674 = vmul.f32 %v666, %v670
        %v675 = vmul.f32 %v664, %v671
        %v676 = vadd.f32 %v650, %v672
        %v677 = vadd.f32 %v651, %v673
        %v678 = vadd.f32 %v652, %v674
        %v679 = vadd.f32 %v653, %v675
        %680 = vrot.lane.b32.xlu0 %v459, 34
        %v681 = vpop.permute.xlu0 %680
        %682 = vrot.lane.b32.xlu0 %v461, 34
        %v683 = vpop.permute.xlu0 %682
        %684 = vrot.lane.b32.xlu0 %v460, 34
        %v685 = vpop.permute.xlu0 %684
        %686 = vrot.lane.b32.xlu0 %v462, 34
        %v687 = vpop.permute.xlu0 %686
        %vm688 = vcmp.lt.s32.totalorder %v484, 34
        %v689 = vsel %vm688, %v681, %v685
        %v690 = vsel %vm688, %v683, %v687
        %v691 = vsel %vm688, %v685, %v681
        %v692 = vsel %vm688, %v687, %v683
        %s693 = scalar_lea.vmem [#allocation4], 256
        %v694 = vld [vmem:[%s693] sm:$0xff]
        %v695 = vld [vmem:[%s693 + $0x8] sm:$0xff]
        %v696 = vld [vmem:[%s693 + $0x10] sm:$0xff]
        %v697 = vld [vmem:[%s693 + $0x18] sm:$0xff]
        %v698 = vmul.f32 %v691, %v694
        %v699 = vmul.f32 %v689, %v695
        %v700 = vmul.f32 %v692, %v696
        %v701 = vmul.f32 %v690, %v697
        %v702 = vadd.f32 %v676, %v698
        %v703 = vadd.f32 %v677, %v699
        %v704 = vadd.f32 %v678, %v700
        %v705 = vadd.f32 %v679, %v701
        %706 = vrot.lane.b32.xlu0 %v459, 33
        %v707 = vpop.permute.xlu0 %706
        %708 = vrot.lane.b32.xlu0 %v461, 33
        %v709 = vpop.permute.xlu0 %708
        %710 = vrot.lane.b32.xlu0 %v460, 33
        %v711 = vpop.permute.xlu0 %710
        %712 = vrot.lane.b32.xlu0 %v462, 33
        %v713 = vpop.permute.xlu0 %712
        %vm714 = vcmp.lt.s32.totalorder %v484, 33
        %v715 = vsel %vm714, %v707, %v711
        %v716 = vsel %vm714, %v709, %v713
        %v717 = vsel %vm714, %v711, %v707
        %v718 = vsel %vm714, %v713, %v709
        %s719 = scalar_lea.vmem [#allocation4], 288
        %v720 = vld [vmem:[%s719] sm:$0xff]
        %v721 = vld [vmem:[%s719 + $0x8] sm:$0xff]
        %v722 = vld [vmem:[%s719 + $0x10] sm:$0xff]
        %v723 = vld [vmem:[%s719 + $0x18] sm:$0xff]
        %v724 = vmul.f32 %v717, %v720
        %v725 = vmul.f32 %v715, %v721
        %v726 = vmul.f32 %v718, %v722
        %v727 = vmul.f32 %v716, %v723
        %v728 = vadd.f32 %v702, %v724
        %v729 = vadd.f32 %v703, %v725
        %v730 = vadd.f32 %v704, %v726
        %v731 = vadd.f32 %v705, %v727
        %732 = vrot.lane.b32.xlu0 %v459, 32
        %v733 = vpop.permute.xlu0 %732
        %734 = vrot.lane.b32.xlu0 %v461, 32
        %v735 = vpop.permute.xlu0 %734
        %736 = vrot.lane.b32.xlu0 %v460, 32
        %v737 = vpop.permute.xlu0 %736
        %738 = vrot.lane.b32.xlu0 %v462, 32
        %v739 = vpop.permute.xlu0 %738
        %vm740 = vcmp.lt.s32.totalorder %v484, 32
        %v741 = vsel %vm740, %v733, %v737
        %v742 = vsel %vm740, %v735, %v739
        %v743 = vsel %vm740, %v737, %v733
        %v744 = vsel %vm740, %v739, %v735
        %s745 = scalar_lea.vmem [#allocation4], 320
        %v746 = vld [vmem:[%s745] sm:$0xff]
        %v747 = vld [vmem:[%s745 + $0x8] sm:$0xff]
        %v748 = vld [vmem:[%s745 + $0x10] sm:$0xff]
        %v749 = vld [vmem:[%s745 + $0x18] sm:$0xff]
        %v750 = vmul.f32 %v743, %v746
        %v751 = vmul.f32 %v741, %v747
        %v752 = vmul.f32 %v744, %v748
        %v753 = vmul.f32 %v742, %v749
        %v754 = vadd.f32 %v728, %v750
        %v755 = vadd.f32 %v729, %v751
        %v756 = vadd.f32 %v730, %v752
        %v757 = vadd.f32 %v731, %v753
        %758 = vrot.lane.b32.xlu0 %v459, 31
        %v759 = vpop.permute.xlu0 %758
        %760 = vrot.lane.b32.xlu0 %v461, 31
        %v761 = vpop.permute.xlu0 %760
        %762 = vrot.lane.b32.xlu0 %v460, 31
        %v763 = vpop.permute.xlu0 %762
        %764 = vrot.lane.b32.xlu0 %v462, 31
        %v765 = vpop.permute.xlu0 %764
        %vm766 = vcmp.lt.s32.totalorder %v484, 31
        %v767 = vsel %vm766, %v759, %v763
        %v768 = vsel %vm766, %v761, %v765
        %v769 = vsel %vm766, %v763, %v759
        %v770 = vsel %vm766, %v765, %v761
        %s771 = scalar_lea.vmem [#allocation4], 352
        %v772 = vld [vmem:[%s771] sm:$0xff]
        %v773 = vld [vmem:[%s771 + $0x8] sm:$0xff]
        %v774 = vld [vmem:[%s771 + $0x10] sm:$0xff]
        %v775 = vld [vmem:[%s771 + $0x18] sm:$0xff]
        %v776 = vmul.f32 %v769, %v772
        %v777 = vmul.f32 %v767, %v773
        %v778 = vmul.f32 %v770, %v774
        %v779 = vmul.f32 %v768, %v775
        %v780 = vadd.f32 %v754, %v776
        %v781 = vadd.f32 %v755, %v777
        %v782 = vadd.f32 %v756, %v778
        %v783 = vadd.f32 %v757, %v779
        %784 = vrot.lane.b32.xlu0 %v459, 30
        %v785 = vpop.permute.xlu0 %784
        %786 = vrot.lane.b32.xlu0 %v461, 30
        %v787 = vpop.permute.xlu0 %786
        %788 = vrot.lane.b32.xlu0 %v460, 30
        %v789 = vpop.permute.xlu0 %788
        %790 = vrot.lane.b32.xlu0 %v462, 30
        %v791 = vpop.permute.xlu0 %790
        %vm792 = vcmp.lt.s32.totalorder %v484, 30
        %v793 = vsel %vm792, %v785, %v789
        %v794 = vsel %vm792, %v787, %v791
        %v795 = vsel %vm792, %v789, %v785
        %v796 = vsel %vm792, %v791, %v787
        %s797 = scalar_lea.vmem [#allocation4], 384
        %v798 = vld [vmem:[%s797] sm:$0xff]
        %v799 = vld [vmem:[%s797 + $0x8] sm:$0xff]
        %v800 = vld [vmem:[%s797 + $0x10] sm:$0xff]
        %v801 = vld [vmem:[%s797 + $0x18] sm:$0xff]
        %v802 = vmul.f32 %v795, %v798
        %v803 = vmul.f32 %v793, %v799
        %v804 = vmul.f32 %v796, %v800
        %v805 = vmul.f32 %v794, %v801
        %v806 = vadd.f32 %v780, %v802
        %v807 = vadd.f32 %v781, %v803
        %v808 = vadd.f32 %v782, %v804
        %v809 = vadd.f32 %v783, %v805
        %810 = vrot.lane.b32.xlu0 %v459, 29
        %v811 = vpop.permute.xlu0 %810
        %812 = vrot.lane.b32.xlu0 %v461, 29
        %v813 = vpop.permute.xlu0 %812
        %814 = vrot.lane.b32.xlu0 %v460, 29
        %v815 = vpop.permute.xlu0 %814
        %816 = vrot.lane.b32.xlu0 %v462, 29
        %v817 = vpop.permute.xlu0 %816
        %vm818 = vcmp.lt.s32.totalorder %v484, 29
        %v819 = vsel %vm818, %v811, %v815
        %v820 = vsel %vm818, %v813, %v817
        %v821 = vsel %vm818, %v815, %v811
        %v822 = vsel %vm818, %v817, %v813
        %s823 = scalar_lea.vmem [#allocation4], 416
        %v824 = vld [vmem:[%s823] sm:$0xff]
        %v825 = vld [vmem:[%s823 + $0x8] sm:$0xff]
        %v826 = vld [vmem:[%s823 + $0x10] sm:$0xff]
        %v827 = vld [vmem:[%s823 + $0x18] sm:$0xff]
        %v828 = vmul.f32 %v821, %v824
        %v829 = vmul.f32 %v819, %v825
        %v830 = vmul.f32 %v822, %v826
        %v831 = vmul.f32 %v820, %v827
        %v832 = vadd.f32 %v806, %v828
        %v833 = vadd.f32 %v807, %v829
        %v834 = vadd.f32 %v808, %v830
        %v835 = vadd.f32 %v809, %v831
        %836 = vrot.lane.b32.xlu0 %v459, 19
        %v837 = vpop.permute.xlu0 %836
        %838 = vrot.lane.b32.xlu0 %v461, 19
        %v839 = vpop.permute.xlu0 %838
        %840 = vrot.lane.b32.xlu0 %v460, 19
        %v841 = vpop.permute.xlu0 %840
        %842 = vrot.lane.b32.xlu0 %v462, 19
        %v843 = vpop.permute.xlu0 %842
        %vm844 = vcmp.lt.s32.totalorder %v484, 19
        %v845 = vsel %vm844, %v837, %v841
        %v846 = vsel %vm844, %v839, %v843
        %v847 = vsel %vm844, %v841, %v837
        %v848 = vsel %vm844, %v843, %v839
        %s849 = scalar_lea.vmem [#allocation4], 448
        %v850 = vld [vmem:[%s849] sm:$0xff]
        %v851 = vld [vmem:[%s849 + $0x8] sm:$0xff]
        %v852 = vld [vmem:[%s849 + $0x10] sm:$0xff]
        %v853 = vld [vmem:[%s849 + $0x18] sm:$0xff]
        %v854 = vmul.f32 %v847, %v850
        %v855 = vmul.f32 %v845, %v851
        %v856 = vmul.f32 %v848, %v852
        %v857 = vmul.f32 %v846, %v853
        %v858 = vadd.f32 %v832, %v854
        %v859 = vadd.f32 %v833, %v855
        %v860 = vadd.f32 %v834, %v856
        %v861 = vadd.f32 %v835, %v857
        %862 = vrot.lane.b32.xlu0 %v459, 18
        %v863 = vpop.permute.xlu0 %862
        %864 = vrot.lane.b32.xlu0 %v461, 18
        %v865 = vpop.permute.xlu0 %864
        %866 = vrot.lane.b32.xlu0 %v460, 18
        %v867 = vpop.permute.xlu0 %866
        %868 = vrot.lane.b32.xlu0 %v462, 18
        %v869 = vpop.permute.xlu0 %868
        %vm870 = vcmp.lt.s32.totalorder %v484, 18
        %v871 = vsel %vm870, %v863, %v867
        %v872 = vsel %vm870, %v865, %v869
        %v873 = vsel %vm870, %v867, %v863
        %v874 = vsel %vm870, %v869, %v865
        %s875 = scalar_lea.vmem [#allocation4], 480
        %v876 = vld [vmem:[%s875] sm:$0xff]
        %v877 = vld [vmem:[%s875 + $0x8] sm:$0xff]
        %v878 = vld [vmem:[%s875 + $0x10] sm:$0xff]
        %v879 = vld [vmem:[%s875 + $0x18] sm:$0xff]
        %v880 = vmul.f32 %v873, %v876
        %v881 = vmul.f32 %v871, %v877
        %v882 = vmul.f32 %v874, %v878
        %v883 = vmul.f32 %v872, %v879
        %v884 = vadd.f32 %v858, %v880
        %v885 = vadd.f32 %v859, %v881
        %v886 = vadd.f32 %v860, %v882
        %v887 = vadd.f32 %v861, %v883
        %888 = vrot.lane.b32.xlu0 %v459, 17
        %v889 = vpop.permute.xlu0 %888
        %890 = vrot.lane.b32.xlu0 %v461, 17
        %v891 = vpop.permute.xlu0 %890
        %892 = vrot.lane.b32.xlu0 %v460, 17
        %v893 = vpop.permute.xlu0 %892
        %894 = vrot.lane.b32.xlu0 %v462, 17
        %v895 = vpop.permute.xlu0 %894
        %vm896 = vcmp.lt.s32.totalorder %v484, 17
        %v897 = vsel %vm896, %v889, %v893
        %v898 = vsel %vm896, %v891, %v895
        %v899 = vsel %vm896, %v893, %v889
        %v900 = vsel %vm896, %v895, %v891
        %s901 = scalar_lea.vmem [#allocation4], 512
        %v902 = vld [vmem:[%s901] sm:$0xff]
        %v903 = vld [vmem:[%s901 + $0x8] sm:$0xff]
        %v904 = vld [vmem:[%s901 + $0x10] sm:$0xff]
        %v905 = vld [vmem:[%s901 + $0x18] sm:$0xff]
        %v906 = vmul.f32 %v899, %v902
        %v907 = vmul.f32 %v897, %v903
        %v908 = vmul.f32 %v900, %v904
        %v909 = vmul.f32 %v898, %v905
        %v910 = vadd.f32 %v884, %v906
        %v911 = vadd.f32 %v885, %v907
        %v912 = vadd.f32 %v886, %v908
        %v913 = vadd.f32 %v887, %v909
        %914 = vrot.lane.b32.xlu0 %v459, 16
        %v915 = vpop.permute.xlu0 %914
        %916 = vrot.lane.b32.xlu0 %v461, 16
        %v917 = vpop.permute.xlu0 %916
        %918 = vrot.lane.b32.xlu0 %v460, 16
        %v919 = vpop.permute.xlu0 %918
        %920 = vrot.lane.b32.xlu0 %v462, 16
        %v921 = vpop.permute.xlu0 %920
        %vm922 = vcmp.lt.s32.totalorder %v484, 16
        %v923 = vsel %vm922, %v915, %v919
        %v924 = vsel %vm922, %v917, %v921
        %v925 = vsel %vm922, %v919, %v915
        %v926 = vsel %vm922, %v921, %v917
        %s927 = scalar_lea.vmem [#allocation4], 544
        %v928 = vld [vmem:[%s927] sm:$0xff]
        %v929 = vld [vmem:[%s927 + $0x8] sm:$0xff]
        %v930 = vld [vmem:[%s927 + $0x10] sm:$0xff]
        %v931 = vld [vmem:[%s927 + $0x18] sm:$0xff]
        %v932 = vmul.f32 %v925, %v928
        %v933 = vmul.f32 %v923, %v929
        %v934 = vmul.f32 %v926, %v930
        %v935 = vmul.f32 %v924, %v931
        %v936 = vadd.f32 %v910, %v932
        %v937 = vadd.f32 %v911, %v933
        %v938 = vadd.f32 %v912, %v934
        %v939 = vadd.f32 %v913, %v935
        %940 = vrot.lane.b32.xlu0 %v459, 15
        %v941 = vpop.permute.xlu0 %940
        %942 = vrot.lane.b32.xlu0 %v461, 15
        %v943 = vpop.permute.xlu0 %942
        %944 = vrot.lane.b32.xlu0 %v460, 15
        %v945 = vpop.permute.xlu0 %944
        %946 = vrot.lane.b32.xlu0 %v462, 15
        %v947 = vpop.permute.xlu0 %946
        %vm948 = vcmp.lt.s32.totalorder %v484, 15
        %v949 = vsel %vm948, %v941, %v945
        %v950 = vsel %vm948, %v943, %v947
        %v951 = vsel %vm948, %v945, %v941
        %v952 = vsel %vm948, %v947, %v943
        %s953 = scalar_lea.vmem [#allocation4], 576
        %v954 = vld [vmem:[%s953] sm:$0xff]
        %v955 = vld [vmem:[%s953 + $0x8] sm:$0xff]
        %v956 = vld [vmem:[%s953 + $0x10] sm:$0xff]
        %v957 = vld [vmem:[%s953 + $0x18] sm:$0xff]
        %v958 = vmul.f32 %v951, %v954
        %v959 = vmul.f32 %v949, %v955
        %v960 = vmul.f32 %v952, %v956
        %v961 = vmul.f32 %v950, %v957
        %v962 = vadd.f32 %v936, %v958
        %v963 = vadd.f32 %v937, %v959
        %v964 = vadd.f32 %v938, %v960
        %v965 = vadd.f32 %v939, %v961
        %966 = vrot.lane.b32.xlu0 %v459, 14
        %v967 = vpop.permute.xlu0 %966
        %968 = vrot.lane.b32.xlu0 %v461, 14
        %v969 = vpop.permute.xlu0 %968
        %970 = vrot.lane.b32.xlu0 %v460, 14
        %v971 = vpop.permute.xlu0 %970
        %972 = vrot.lane.b32.xlu0 %v462, 14
        %v973 = vpop.permute.xlu0 %972
        %vm974 = vcmp.lt.s32.totalorder %v484, 14
        %v975 = vsel %vm974, %v967, %v971
        %v976 = vsel %vm974, %v969, %v973
        %v977 = vsel %vm974, %v971, %v967
        %v978 = vsel %vm974, %v973, %v969
        %s979 = scalar_lea.vmem [#allocation4], 608
        %v980 = vld [vmem:[%s979] sm:$0xff]
        %v981 = vld [vmem:[%s979 + $0x8] sm:$0xff]
        %v982 = vld [vmem:[%s979 + $0x10] sm:$0xff]
        %v983 = vld [vmem:[%s979 + $0x18] sm:$0xff]
        %v984 = vmul.f32 %v977, %v980
        %v985 = vmul.f32 %v975, %v981
        %v986 = vmul.f32 %v978, %v982
        %v987 = vmul.f32 %v976, %v983
        %v988 = vadd.f32 %v962, %v984
        %v989 = vadd.f32 %v963, %v985
        %v990 = vadd.f32 %v964, %v986
        %v991 = vadd.f32 %v965, %v987
        %992 = vrot.lane.b32.xlu0 %v459, 13
        %v993 = vpop.permute.xlu0 %992
        %994 = vrot.lane.b32.xlu0 %v461, 13
        %v995 = vpop.permute.xlu0 %994
        %996 = vrot.lane.b32.xlu0 %v460, 13
        %v997 = vpop.permute.xlu0 %996
        %998 = vrot.lane.b32.xlu0 %v462, 13
        %v999 = vpop.permute.xlu0 %998
        %vm1000 = vcmp.lt.s32.totalorder %v484, 13
        %v1001 = vsel %vm1000, %v993, %v997
        %v1002 = vsel %vm1000, %v995, %v999
        %v1003 = vsel %vm1000, %v997, %v993
        %v1004 = vsel %vm1000, %v999, %v995
        %s1005 = scalar_lea.vmem [#allocation4], 640
        %v1006 = vld [vmem:[%s1005] sm:$0xff]
        %v1007 = vld [vmem:[%s1005 + $0x8] sm:$0xff]
        %v1008 = vld [vmem:[%s1005 + $0x10] sm:$0xff]
        %v1009 = vld [vmem:[%s1005 + $0x18] sm:$0xff]
        %v1010 = vmul.f32 %v1003, %v1006
        %v1011 = vmul.f32 %v1001, %v1007
        %v1012 = vmul.f32 %v1004, %v1008
        %v1013 = vmul.f32 %v1002, %v1009
        %v1014 = vadd.f32 %v988, %v1010
        %v1015 = vadd.f32 %v989, %v1011
        %v1016 = vadd.f32 %v990, %v1012
        %v1017 = vadd.f32 %v991, %v1013
        %1018 = vrot.lane.b32.xlu0 %v459, 3
        %v1019 = vpop.permute.xlu0 %1018
        %1020 = vrot.lane.b32.xlu0 %v461, 3
        %v1021 = vpop.permute.xlu0 %1020
        %1022 = vrot.lane.b32.xlu0 %v460, 3
        %v1023 = vpop.permute.xlu0 %1022
        %1024 = vrot.lane.b32.xlu0 %v462, 3
        %v1025 = vpop.permute.xlu0 %1024
        %vm1026 = vcmp.lt.s32.totalorder %v484, 3
        %v1027 = vsel %vm1026, %v1019, %v1023
        %v1028 = vsel %vm1026, %v1021, %v1025
        %v1029 = vsel %vm1026, %v1023, %v1019
        %v1030 = vsel %vm1026, %v1025, %v1021
        %s1031 = scalar_lea.vmem [#allocation4], 672
        %v1032 = vld [vmem:[%s1031] sm:$0xff]
        %v1033 = vld [vmem:[%s1031 + $0x8] sm:$0xff]
        %v1034 = vld [vmem:[%s1031 + $0x10] sm:$0xff]
        %v1035 = vld [vmem:[%s1031 + $0x18] sm:$0xff]
        %v1036 = vmul.f32 %v1029, %v1032
        %v1037 = vmul.f32 %v1027, %v1033
        %v1038 = vmul.f32 %v1030, %v1034
        %v1039 = vmul.f32 %v1028, %v1035
        %v1040 = vadd.f32 %v1014, %v1036
        %v1041 = vadd.f32 %v1015, %v1037
        %v1042 = vadd.f32 %v1016, %v1038
        %v1043 = vadd.f32 %v1017, %v1039
        %1044 = vrot.lane.b32.xlu0 %v459, 2
        %v1045 = vpop.permute.xlu0 %1044
        %1046 = vrot.lane.b32.xlu0 %v461, 2
        %v1047 = vpop.permute.xlu0 %1046
        %1048 = vrot.lane.b32.xlu0 %v460, 2
        %v1049 = vpop.permute.xlu0 %1048
        %1050 = vrot.lane.b32.xlu0 %v462, 2
        %v1051 = vpop.permute.xlu0 %1050
        %vm1052 = vcmp.lt.s32.totalorder %v484, 2
        %v1053 = vsel %vm1052, %v1045, %v1049
        %v1054 = vsel %vm1052, %v1047, %v1051
        %v1055 = vsel %vm1052, %v1049, %v1045
        %v1056 = vsel %vm1052, %v1051, %v1047
        %s1057 = scalar_lea.vmem [#allocation4], 704
        %v1058 = vld [vmem:[%s1057] sm:$0xff]
        %v1059 = vld [vmem:[%s1057 + $0x8] sm:$0xff]
        %v1060 = vld [vmem:[%s1057 + $0x10] sm:$0xff]
        %v1061 = vld [vmem:[%s1057 + $0x18] sm:$0xff]
        %v1062 = vmul.f32 %v1055, %v1058
        %v1063 = vmul.f32 %v1053, %v1059
        %v1064 = vmul.f32 %v1056, %v1060
        %v1065 = vmul.f32 %v1054, %v1061
        %v1066 = vadd.f32 %v1040, %v1062
        %v1067 = vadd.f32 %v1041, %v1063
        %v1068 = vadd.f32 %v1042, %v1064
        %v1069 = vadd.f32 %v1043, %v1065
        %1070 = vrot.lane.b32.xlu0 %v459, 1
        %v1071 = vpop.permute.xlu0 %1070
        %1072 = vrot.lane.b32.xlu0 %v461, 1
        %v1073 = vpop.permute.xlu0 %1072
        %1074 = vrot.lane.b32.xlu0 %v460, 1
        %v1075 = vpop.permute.xlu0 %1074
        %1076 = vrot.lane.b32.xlu0 %v462, 1
        %v1077 = vpop.permute.xlu0 %1076
        %vm1078 = vcmp.lt.s32.totalorder %v484, 1
        %v1079 = vsel %vm1078, %v1071, %v1075
        %v1080 = vsel %vm1078, %v1073, %v1077
        %v1081 = vsel %vm1078, %v1075, %v1071
        %v1082 = vsel %vm1078, %v1077, %v1073
        %s1083 = scalar_lea.vmem [#allocation4], 736
        %v1084 = vld [vmem:[%s1083] sm:$0xff]
        %v1085 = vld [vmem:[%s1083 + $0x8] sm:$0xff]
        %v1086 = vld [vmem:[%s1083 + $0x10] sm:$0xff]
        %v1087 = vld [vmem:[%s1083 + $0x18] sm:$0xff]
        %v1088 = vmul.f32 %v1081, %v1084
        %v1089 = vmul.f32 %v1079, %v1085
        %v1090 = vmul.f32 %v1082, %v1086
        %v1091 = vmul.f32 %v1080, %v1087
        %v1092 = vadd.f32 %v1066, %v1088
        %v1093 = vadd.f32 %v1067, %v1089
        %v1094 = vadd.f32 %v1068, %v1090
        %v1095 = vadd.f32 %v1069, %v1091
        %s1096 = scalar_lea.vmem [#allocation4], 768
        %v1097 = vld [vmem:[%s1096] sm:$0xff]
        %v1098 = vld [vmem:[%s1096 + $0x8] sm:$0xff]
        %v1099 = vld [vmem:[%s1096 + $0x10] sm:$0xff]
        %v1100 = vld [vmem:[%s1096 + $0x18] sm:$0xff]
        %v1101 = vmul.f32 %v459, %v1097
        %v1102 = vmul.f32 %v460, %v1098
        %v1103 = vmul.f32 %v461, %v1099
        %v1104 = vmul.f32 %v462, %v1100
        %v1105 = vadd.f32 %v1092, %v1101
        %v1106 = vadd.f32 %v1093, %v1102
        %v1107 = vadd.f32 %v1094, %v1103
        %v1108 = vadd.f32 %v1095, %v1104
        %1109 = vrot.lane.b32.xlu0 %v459, 127
        %v1110 = vpop.permute.xlu0 %1109
        %1111 = vrot.lane.b32.xlu0 %v461, 127
        %v1112 = vpop.permute.xlu0 %1111
        %1113 = vrot.lane.b32.xlu0 %v460, 127
        %v1114 = vpop.permute.xlu0 %1113
        %1115 = vrot.lane.b32.xlu0 %v462, 127
        %v1116 = vpop.permute.xlu0 %1115
        %vm1117 = vcmp.lt.s32.totalorder %v484, 127
        %v1118 = vsel %vm1117, %v1110, %v1114
        %v1119 = vsel %vm1117, %v1112, %v1116
        %v1120 = vsel %vm1117, %v1114, %v1110
        %v1121 = vsel %vm1117, %v1116, %v1112
        %s1122 = scalar_lea.vmem [#allocation4], 800
        %v1123 = vld [vmem:[%s1122] sm:$0xff]
        %v1124 = vld [vmem:[%s1122 + $0x8] sm:$0xff]
        %v1125 = vld [vmem:[%s1122 + $0x10] sm:$0xff]
        %v1126 = vld [vmem:[%s1122 + $0x18] sm:$0xff]
        %v1127 = vmul.f32 %v1118, %v1123
        %v1128 = vmul.f32 %v1120, %v1124
        %v1129 = vmul.f32 %v1119, %v1125
        %v1130 = vmul.f32 %v1121, %v1126
        %v1131 = vadd.f32 %v1105, %v1127
        %v1132 = vadd.f32 %v1106, %v1128
        %v1133 = vadd.f32 %v1107, %v1129
        %v1134 = vadd.f32 %v1108, %v1130
        %1135 = vrot.lane.b32.xlu0 %v459, 126
        %v1136 = vpop.permute.xlu0 %1135
        %1137 = vrot.lane.b32.xlu0 %v461, 126
        %v1138 = vpop.permute.xlu0 %1137
        %1139 = vrot.lane.b32.xlu0 %v460, 126
        %v1140 = vpop.permute.xlu0 %1139
        %1141 = vrot.lane.b32.xlu0 %v462, 126
        %v1142 = vpop.permute.xlu0 %1141
        %vm1143 = vcmp.lt.s32.totalorder %v484, 126
        %v1144 = vsel %vm1143, %v1136, %v1140
        %v1145 = vsel %vm1143, %v1138, %v1142
        %v1146 = vsel %vm1143, %v1140, %v1136
        %v1147 = vsel %vm1143, %v1142, %v1138
        %s1148 = scalar_lea.vmem [#allocation4], 832
        %v1149 = vld [vmem:[%s1148] sm:$0xff]
        %v1150 = vld [vmem:[%s1148 + $0x8] sm:$0xff]
        %v1151 = vld [vmem:[%s1148 + $0x10] sm:$0xff]
        %v1152 = vld [vmem:[%s1148 + $0x18] sm:$0xff]
        %v1153 = vmul.f32 %v1144, %v1149
        %v1154 = vmul.f32 %v1146, %v1150
        %v1155 = vmul.f32 %v1145, %v1151
        %v1156 = vmul.f32 %v1147, %v1152
        %v1157 = vadd.f32 %v1131, %v1153
        %v1158 = vadd.f32 %v1132, %v1154
        %v1159 = vadd.f32 %v1133, %v1155
        %v1160 = vadd.f32 %v1134, %v1156
        %1161 = vrot.lane.b32.xlu0 %v459, 125
        %v1162 = vpop.permute.xlu0 %1161
        %1163 = vrot.lane.b32.xlu0 %v461, 125
        %v1164 = vpop.permute.xlu0 %1163
        %1165 = vrot.lane.b32.xlu0 %v460, 125
        %v1166 = vpop.permute.xlu0 %1165
        %1167 = vrot.lane.b32.xlu0 %v462, 125
        %v1168 = vpop.permute.xlu0 %1167
        %vm1169 = vcmp.lt.s32.totalorder %v484, 125
        %v1170 = vsel %vm1169, %v1162, %v1166
        %v1171 = vsel %vm1169, %v1164, %v1168
        %v1172 = vsel %vm1169, %v1166, %v1162
        %v1173 = vsel %vm1169, %v1168, %v1164
        %s1174 = scalar_lea.vmem [#allocation4], 864
        %v1175 = vld [vmem:[%s1174] sm:$0xff]
        %v1176 = vld [vmem:[%s1174 + $0x8] sm:$0xff]
        %v1177 = vld [vmem:[%s1174 + $0x10] sm:$0xff]
        %v1178 = vld [vmem:[%s1174 + $0x18] sm:$0xff]
        %v1179 = vmul.f32 %v1170, %v1175
        %v1180 = vmul.f32 %v1172, %v1176
        %v1181 = vmul.f32 %v1171, %v1177
        %v1182 = vmul.f32 %v1173, %v1178
        %v1183 = vadd.f32 %v1157, %v1179
        %v1184 = vadd.f32 %v1158, %v1180
        %v1185 = vadd.f32 %v1159, %v1181
        %v1186 = vadd.f32 %v1160, %v1182
        %1187 = vrot.lane.b32.xlu0 %v459, 115
        %v1188 = vpop.permute.xlu0 %1187
        %1189 = vrot.lane.b32.xlu0 %v461, 115
        %v1190 = vpop.permute.xlu0 %1189
        %1191 = vrot.lane.b32.xlu0 %v460, 115
        %v1192 = vpop.permute.xlu0 %1191
        %1193 = vrot.lane.b32.xlu0 %v462, 115
        %v1194 = vpop.permute.xlu0 %1193
        %vm1195 = vcmp.lt.s32.totalorder %v484, 115
        %v1196 = vsel %vm1195, %v1188, %v1192
        %v1197 = vsel %vm1195, %v1190, %v1194
        %v1198 = vsel %vm1195, %v1192, %v1188
        %v1199 = vsel %vm1195, %v1194, %v1190
        %s1200 = scalar_lea.vmem [#allocation4], 896
        %v1201 = vld [vmem:[%s1200] sm:$0xff]
        %v1202 = vld [vmem:[%s1200 + $0x8] sm:$0xff]
        %v1203 = vld [vmem:[%s1200 + $0x10] sm:$0xff]
        %v1204 = vld [vmem:[%s1200 + $0x18] sm:$0xff]
        %v1205 = vmul.f32 %v1196, %v1201
        %v1206 = vmul.f32 %v1198, %v1202
        %v1207 = vmul.f32 %v1197, %v1203
        %v1208 = vmul.f32 %v1199, %v1204
        %v1209 = vadd.f32 %v1183, %v1205
        %v1210 = vadd.f32 %v1184, %v1206
        %v1211 = vadd.f32 %v1185, %v1207
        %v1212 = vadd.f32 %v1186, %v1208
        %1213 = vrot.lane.b32.xlu0 %v459, 114
        %v1214 = vpop.permute.xlu0 %1213
        %1215 = vrot.lane.b32.xlu0 %v461, 114
        %v1216 = vpop.permute.xlu0 %1215
        %1217 = vrot.lane.b32.xlu0 %v460, 114
        %v1218 = vpop.permute.xlu0 %1217
        %1219 = vrot.lane.b32.xlu0 %v462, 114
        %v1220 = vpop.permute.xlu0 %1219
        %vm1221 = vcmp.lt.s32.totalorder %v484, 114
        %v1222 = vsel %vm1221, %v1214, %v1218
        %v1223 = vsel %vm1221, %v1216, %v1220
        %v1224 = vsel %vm1221, %v1218, %v1214
        %v1225 = vsel %vm1221, %v1220, %v1216
        %s1226 = scalar_lea.vmem [#allocation4], 928
        %v1227 = vld [vmem:[%s1226] sm:$0xff]
        %v1228 = vld [vmem:[%s1226 + $0x8] sm:$0xff]
        %v1229 = vld [vmem:[%s1226 + $0x10] sm:$0xff]
        %v1230 = vld [vmem:[%s1226 + $0x18] sm:$0xff]
        %v1231 = vmul.f32 %v1222, %v1227
        %v1232 = vmul.f32 %v1224, %v1228
        %v1233 = vmul.f32 %v1223, %v1229
        %v1234 = vmul.f32 %v1225, %v1230
        %v1235 = vadd.f32 %v1209, %v1231
        %v1236 = vadd.f32 %v1210, %v1232
        %v1237 = vadd.f32 %v1211, %v1233
        %v1238 = vadd.f32 %v1212, %v1234
        %1239 = vrot.lane.b32.xlu0 %v459, 113
        %v1240 = vpop.permute.xlu0 %1239
        %1241 = vrot.lane.b32.xlu0 %v461, 113
        %v1242 = vpop.permute.xlu0 %1241
        %1243 = vrot.lane.b32.xlu0 %v460, 113
        %v1244 = vpop.permute.xlu0 %1243
        %1245 = vrot.lane.b32.xlu0 %v462, 113
        %v1246 = vpop.permute.xlu0 %1245
        %vm1247 = vcmp.lt.s32.totalorder %v484, 113
        %v1248 = vsel %vm1247, %v1240, %v1244
        %v1249 = vsel %vm1247, %v1242, %v1246
        %v1250 = vsel %vm1247, %v1244, %v1240
        %v1251 = vsel %vm1247, %v1246, %v1242
        %s1252 = scalar_lea.vmem [#allocation4], 960
        %v1253 = vld [vmem:[%s1252] sm:$0xff]
        %v1254 = vld [vmem:[%s1252 + $0x8] sm:$0xff]
        %v1255 = vld [vmem:[%s1252 + $0x10] sm:$0xff]
        %v1256 = vld [vmem:[%s1252 + $0x18] sm:$0xff]
        %v1257 = vmul.f32 %v1248, %v1253
        %v1258 = vmul.f32 %v1250, %v1254
        %v1259 = vmul.f32 %v1249, %v1255
        %v1260 = vmul.f32 %v1251, %v1256
        %v1261 = vadd.f32 %v1235, %v1257
        %v1262 = vadd.f32 %v1236, %v1258
        %v1263 = vadd.f32 %v1237, %v1259
        %v1264 = vadd.f32 %v1238, %v1260
        %1265 = vrot.lane.b32.xlu0 %v459, 112
        %v1266 = vpop.permute.xlu0 %1265
        %1267 = vrot.lane.b32.xlu0 %v461, 112
        %v1268 = vpop.permute.xlu0 %1267
        %1269 = vrot.lane.b32.xlu0 %v460, 112
        %v1270 = vpop.permute.xlu0 %1269
        %1271 = vrot.lane.b32.xlu0 %v462, 112
        %v1272 = vpop.permute.xlu0 %1271
        %vm1273 = vcmp.lt.s32.totalorder %v484, 112
        %v1274 = vsel %vm1273, %v1266, %v1270
        %v1275 = vsel %vm1273, %v1268, %v1272
        %v1276 = vsel %vm1273, %v1270, %v1266
        %v1277 = vsel %vm1273, %v1272, %v1268
        %s1278 = scalar_lea.vmem [#allocation4], 992
        %v1279 = vld [vmem:[%s1278] sm:$0xff]
        %v1280 = vld [vmem:[%s1278 + $0x8] sm:$0xff]
        %v1281 = vld [vmem:[%s1278 + $0x10] sm:$0xff]
        %v1282 = vld [vmem:[%s1278 + $0x18] sm:$0xff]
        %v1283 = vmul.f32 %v1274, %v1279
        %v1284 = vmul.f32 %v1276, %v1280
        %v1285 = vmul.f32 %v1275, %v1281
        %v1286 = vmul.f32 %v1277, %v1282
        %v1287 = vadd.f32 %v1261, %v1283
        %v1288 = vadd.f32 %v1262, %v1284
        %v1289 = vadd.f32 %v1263, %v1285
        %v1290 = vadd.f32 %v1264, %v1286
        %1291 = vrot.lane.b32.xlu0 %v459, 111
        %v1292 = vpop.permute.xlu0 %1291
        %1293 = vrot.lane.b32.xlu0 %v461, 111
        %v1294 = vpop.permute.xlu0 %1293
        %1295 = vrot.lane.b32.xlu0 %v460, 111
        %v1296 = vpop.permute.xlu0 %1295
        %1297 = vrot.lane.b32.xlu0 %v462, 111
        %v1298 = vpop.permute.xlu0 %1297
        %vm1299 = vcmp.lt.s32.totalorder %v484, 111
        %v1300 = vsel %vm1299, %v1292, %v1296
        %v1301 = vsel %vm1299, %v1294, %v1298
        %v1302 = vsel %vm1299, %v1296, %v1292
        %v1303 = vsel %vm1299, %v1298, %v1294
        %s1304 = scalar_lea.vmem [#allocation4], 1024
        %v1305 = vld [vmem:[%s1304] sm:$0xff]
        %v1306 = vld [vmem:[%s1304 + $0x8] sm:$0xff]
        %v1307 = vld [vmem:[%s1304 + $0x10] sm:$0xff]
        %v1308 = vld [vmem:[%s1304 + $0x18] sm:$0xff]
        %v1309 = vmul.f32 %v1300, %v1305
        %v1310 = vmul.f32 %v1302, %v1306
        %v1311 = vmul.f32 %v1301, %v1307
        %v1312 = vmul.f32 %v1303, %v1308
        %v1313 = vadd.f32 %v1287, %v1309
        %v1314 = vadd.f32 %v1288, %v1310
        %v1315 = vadd.f32 %v1289, %v1311
        %v1316 = vadd.f32 %v1290, %v1312
        %1317 = vrot.lane.b32.xlu0 %v459, 110
        %v1318 = vpop.permute.xlu0 %1317
        %1319 = vrot.lane.b32.xlu0 %v461, 110
        %v1320 = vpop.permute.xlu0 %1319
        %1321 = vrot.lane.b32.xlu0 %v460, 110
        %v1322 = vpop.permute.xlu0 %1321
        %1323 = vrot.lane.b32.xlu0 %v462, 110
        %v1324 = vpop.permute.xlu0 %1323
        %vm1325 = vcmp.lt.s32.totalorder %v484, 110
        %v1326 = vsel %vm1325, %v1318, %v1322
        %v1327 = vsel %vm1325, %v1320, %v1324
        %v1328 = vsel %vm1325, %v1322, %v1318
        %v1329 = vsel %vm1325, %v1324, %v1320
        %s1330 = scalar_lea.vmem [#allocation4], 1056
        %v1331 = vld [vmem:[%s1330] sm:$0xff]
        %v1332 = vld [vmem:[%s1330 + $0x8] sm:$0xff]
        %v1333 = vld [vmem:[%s1330 + $0x10] sm:$0xff]
        %v1334 = vld [vmem:[%s1330 + $0x18] sm:$0xff]
        %v1335 = vmul.f32 %v1326, %v1331
        %v1336 = vmul.f32 %v1328, %v1332
        %v1337 = vmul.f32 %v1327, %v1333
        %v1338 = vmul.f32 %v1329, %v1334
        %v1339 = vadd.f32 %v1313, %v1335
        %v1340 = vadd.f32 %v1314, %v1336
        %v1341 = vadd.f32 %v1315, %v1337
        %v1342 = vadd.f32 %v1316, %v1338
        %1343 = vrot.lane.b32.xlu0 %v459, 109
        %v1344 = vpop.permute.xlu0 %1343
        %1345 = vrot.lane.b32.xlu0 %v461, 109
        %v1346 = vpop.permute.xlu0 %1345
        %1347 = vrot.lane.b32.xlu0 %v460, 109
        %v1348 = vpop.permute.xlu0 %1347
        %1349 = vrot.lane.b32.xlu0 %v462, 109
        %v1350 = vpop.permute.xlu0 %1349
        %vm1351 = vcmp.lt.s32.totalorder %v484, 109
        %v1352 = vsel %vm1351, %v1344, %v1348
        %v1353 = vsel %vm1351, %v1346, %v1350
        %v1354 = vsel %vm1351, %v1348, %v1344
        %v1355 = vsel %vm1351, %v1350, %v1346
        %s1356 = scalar_lea.vmem [#allocation4], 1088
        %v1357 = vld [vmem:[%s1356] sm:$0xff]
        %v1358 = vld [vmem:[%s1356 + $0x8] sm:$0xff]
        %v1359 = vld [vmem:[%s1356 + $0x10] sm:$0xff]
        %v1360 = vld [vmem:[%s1356 + $0x18] sm:$0xff]
        %v1361 = vmul.f32 %v1352, %v1357
        %v1362 = vmul.f32 %v1354, %v1358
        %v1363 = vmul.f32 %v1353, %v1359
        %v1364 = vmul.f32 %v1355, %v1360
        %v1365 = vadd.f32 %v1339, %v1361
        %v1366 = vadd.f32 %v1340, %v1362
        %v1367 = vadd.f32 %v1341, %v1363
        %v1368 = vadd.f32 %v1342, %v1364
        %1369 = vrot.lane.b32.xlu0 %v459, 99
        %v1370 = vpop.permute.xlu0 %1369
        %1371 = vrot.lane.b32.xlu0 %v461, 99
        %v1372 = vpop.permute.xlu0 %1371
        %1373 = vrot.lane.b32.xlu0 %v460, 99
        %v1374 = vpop.permute.xlu0 %1373
        %1375 = vrot.lane.b32.xlu0 %v462, 99
        %v1376 = vpop.permute.xlu0 %1375
        %vm1377 = vcmp.lt.s32.totalorder %v484, 99
        %v1378 = vsel %vm1377, %v1370, %v1374
        %v1379 = vsel %vm1377, %v1372, %v1376
        %v1380 = vsel %vm1377, %v1374, %v1370
        %v1381 = vsel %vm1377, %v1376, %v1372
        %s1382 = scalar_lea.vmem [#allocation4], 1120
        %v1383 = vld [vmem:[%s1382] sm:$0xff]
        %v1384 = vld [vmem:[%s1382 + $0x8] sm:$0xff]
        %v1385 = vld [vmem:[%s1382 + $0x10] sm:$0xff]
        %v1386 = vld [vmem:[%s1382 + $0x18] sm:$0xff]
        %v1387 = vmul.f32 %v1378, %v1383
        %v1388 = vmul.f32 %v1380, %v1384
        %v1389 = vmul.f32 %v1379, %v1385
        %v1390 = vmul.f32 %v1381, %v1386
        %v1391 = vadd.f32 %v1365, %v1387
        %v1392 = vadd.f32 %v1366, %v1388
        %v1393 = vadd.f32 %v1367, %v1389
        %v1394 = vadd.f32 %v1368, %v1390
        %1395 = vrot.lane.b32.xlu0 %v459, 98
        %v1396 = vpop.permute.xlu0 %1395
        %1397 = vrot.lane.b32.xlu0 %v461, 98
        %v1398 = vpop.permute.xlu0 %1397
        %1399 = vrot.lane.b32.xlu0 %v460, 98
        %v1400 = vpop.permute.xlu0 %1399
        %1401 = vrot.lane.b32.xlu0 %v462, 98
        %v1402 = vpop.permute.xlu0 %1401
        %vm1403 = vcmp.lt.s32.totalorder %v484, 98
        %v1404 = vsel %vm1403, %v1396, %v1400
        %v1405 = vsel %vm1403, %v1398, %v1402
        %v1406 = vsel %vm1403, %v1400, %v1396
        %v1407 = vsel %vm1403, %v1402, %v1398
        %s1408 = scalar_lea.vmem [#allocation4], 1152
        %v1409 = vld [vmem:[%s1408] sm:$0xff]
        %v1410 = vld [vmem:[%s1408 + $0x8] sm:$0xff]
        %v1411 = vld [vmem:[%s1408 + $0x10] sm:$0xff]
        %v1412 = vld [vmem:[%s1408 + $0x18] sm:$0xff]
        %v1413 = vmul.f32 %v1404, %v1409
        %v1414 = vmul.f32 %v1406, %v1410
        %v1415 = vmul.f32 %v1405, %v1411
        %v1416 = vmul.f32 %v1407, %v1412
        %v1417 = vadd.f32 %v1391, %v1413
        %v1418 = vadd.f32 %v1392, %v1414
        %v1419 = vadd.f32 %v1393, %v1415
        %v1420 = vadd.f32 %v1394, %v1416
        %1421 = vrot.lane.b32.xlu0 %v459, 97
        %v1422 = vpop.permute.xlu0 %1421
        %1423 = vrot.lane.b32.xlu0 %v461, 97
        %v1424 = vpop.permute.xlu0 %1423
        %1425 = vrot.lane.b32.xlu0 %v460, 97
        %v1426 = vpop.permute.xlu0 %1425
        %1427 = vrot.lane.b32.xlu0 %v462, 97
        %v1428 = vpop.permute.xlu0 %1427
        %vm1429 = vcmp.lt.s32.totalorder %v484, 97
        %v1430 = vsel %vm1429, %v1422, %v1426
        %v1431 = vsel %vm1429, %v1424, %v1428
        %v1432 = vsel %vm1429, %v1426, %v1422
        %v1433 = vsel %vm1429, %v1428, %v1424
        %s1434 = scalar_lea.vmem [#allocation4], 1184
        %v1435 = vld [vmem:[%s1434] sm:$0xff]
        %v1436 = vld [vmem:[%s1434 + $0x8] sm:$0xff]
        %v1437 = vld [vmem:[%s1434 + $0x10] sm:$0xff]
        %v1438 = vld [vmem:[%s1434 + $0x18] sm:$0xff]
        %v1439 = vmul.f32 %v1430, %v1435
        %v1440 = vmul.f32 %v1432, %v1436
        %v1441 = vmul.f32 %v1431, %v1437
        %v1442 = vmul.f32 %v1433, %v1438
        %v1443 = vadd.f32 %v1417, %v1439
        %v1444 = vadd.f32 %v1418, %v1440
        %v1445 = vadd.f32 %v1419, %v1441
        %v1446 = vadd.f32 %v1420, %v1442
        %1447 = vrot.lane.b32.xlu0 %v459, 96
        %v1448 = vpop.permute.xlu0 %1447
        %1449 = vrot.lane.b32.xlu0 %v461, 96
        %v1450 = vpop.permute.xlu0 %1449
        %1451 = vrot.lane.b32.xlu0 %v460, 96
        %v1452 = vpop.permute.xlu0 %1451
        %1453 = vrot.lane.b32.xlu0 %v462, 96
        %v1454 = vpop.permute.xlu0 %1453
        %vm1455 = vcmp.lt.s32.totalorder %v484, 96
        %v1456 = vsel %vm1455, %v1448, %v1452
        %v1457 = vsel %vm1455, %v1450, %v1454
        %v1458 = vsel %vm1455, %v1452, %v1448
        %v1459 = vsel %vm1455, %v1454, %v1450
        %s1460 = scalar_lea.vmem [#allocation4], 1216
        %v1461 = vld [vmem:[%s1460] sm:$0xff]
        %v1462 = vld [vmem:[%s1460 + $0x8] sm:$0xff]
        %v1463 = vld [vmem:[%s1460 + $0x10] sm:$0xff]
        %v1464 = vld [vmem:[%s1460 + $0x18] sm:$0xff]
        %v1465 = vmul.f32 %v1456, %v1461
        %v1466 = vmul.f32 %v1458, %v1462
        %v1467 = vmul.f32 %v1457, %v1463
        %v1468 = vmul.f32 %v1459, %v1464
        %v1469 = vadd.f32 %v1443, %v1465
        %v1470 = vadd.f32 %v1444, %v1466
        %v1471 = vadd.f32 %v1445, %v1467
        %v1472 = vadd.f32 %v1446, %v1468
        %1473 = vrot.lane.b32.xlu0 %v459, 95
        %v1474 = vpop.permute.xlu0 %1473
        %1475 = vrot.lane.b32.xlu0 %v461, 95
        %v1476 = vpop.permute.xlu0 %1475
        %1477 = vrot.lane.b32.xlu0 %v460, 95
        %v1478 = vpop.permute.xlu0 %1477
        %1479 = vrot.lane.b32.xlu0 %v462, 95
        %v1480 = vpop.permute.xlu0 %1479
        %vm1481 = vcmp.lt.s32.totalorder %v484, 95
        %v1482 = vsel %vm1481, %v1474, %v1478
        %v1483 = vsel %vm1481, %v1476, %v1480
        %v1484 = vsel %vm1481, %v1478, %v1474
        %v1485 = vsel %vm1481, %v1480, %v1476
        %s1486 = scalar_lea.vmem [#allocation4], 1248
        %v1487 = vld [vmem:[%s1486] sm:$0xff]
        %v1488 = vld [vmem:[%s1486 + $0x8] sm:$0xff]
        %v1489 = vld [vmem:[%s1486 + $0x10] sm:$0xff]
        %v1490 = vld [vmem:[%s1486 + $0x18] sm:$0xff]
        %v1491 = vmul.f32 %v1482, %v1487
        %v1492 = vmul.f32 %v1484, %v1488
        %v1493 = vmul.f32 %v1483, %v1489
        %v1494 = vmul.f32 %v1485, %v1490
        %v1495 = vadd.f32 %v1469, %v1491
        %v1496 = vadd.f32 %v1470, %v1492
        %v1497 = vadd.f32 %v1471, %v1493
        %v1498 = vadd.f32 %v1472, %v1494
        %1499 = vrot.lane.b32.xlu0 %v459, 94
        %v1500 = vpop.permute.xlu0 %1499
        %1501 = vrot.lane.b32.xlu0 %v461, 94
        %v1502 = vpop.permute.xlu0 %1501
        %1503 = vrot.lane.b32.xlu0 %v460, 94
        %v1504 = vpop.permute.xlu0 %1503
        %1505 = vrot.lane.b32.xlu0 %v462, 94
        %v1506 = vpop.permute.xlu0 %1505
        %vm1507 = vcmp.lt.s32.totalorder %v484, 94
        %v1508 = vsel %vm1507, %v1500, %v1504
        %v1509 = vsel %vm1507, %v1502, %v1506
        %v1510 = vsel %vm1507, %v1504, %v1500
        %v1511 = vsel %vm1507, %v1506, %v1502
        %s1512 = scalar_lea.vmem [#allocation4], 1280
        %v1513 = vld [vmem:[%s1512] sm:$0xff]
        %v1514 = vld [vmem:[%s1512 + $0x8] sm:$0xff]
        %v1515 = vld [vmem:[%s1512 + $0x10] sm:$0xff]
        %v1516 = vld [vmem:[%s1512 + $0x18] sm:$0xff]
        %v1517 = vmul.f32 %v1508, %v1513
        %v1518 = vmul.f32 %v1510, %v1514
        %v1519 = vmul.f32 %v1509, %v1515
        %v1520 = vmul.f32 %v1511, %v1516
        %v1521 = vadd.f32 %v1495, %v1517
        %v1522 = vadd.f32 %v1496, %v1518
        %v1523 = vadd.f32 %v1497, %v1519
        %v1524 = vadd.f32 %v1498, %v1520
        %1525 = vrot.lane.b32.xlu0 %v459, 93
        %v1526 = vpop.permute.xlu0 %1525
        %1527 = vrot.lane.b32.xlu0 %v461, 93
        %v1528 = vpop.permute.xlu0 %1527
        %1529 = vrot.lane.b32.xlu0 %v460, 93
        %v1530 = vpop.permute.xlu0 %1529
        %1531 = vrot.lane.b32.xlu0 %v462, 93
        %v1532 = vpop.permute.xlu0 %1531
        %vm1533 = vcmp.lt.s32.totalorder %v484, 93
        %v1534 = vsel %vm1533, %v1526, %v1530
        %v1535 = vsel %vm1533, %v1528, %v1532
        %v1536 = vsel %vm1533, %v1530, %v1526
        %v1537 = vsel %vm1533, %v1532, %v1528
        %s1538 = scalar_lea.vmem [#allocation4], 1312
        %v1539 = vld [vmem:[%s1538] sm:$0xff]
        %v1540 = vld [vmem:[%s1538 + $0x8] sm:$0xff]
        %v1541 = vld [vmem:[%s1538 + $0x10] sm:$0xff]
        %v1542 = vld [vmem:[%s1538 + $0x18] sm:$0xff]
        %v1543 = vmul.f32 %v1534, %v1539
        %v1544 = vmul.f32 %v1536, %v1540
        %v1545 = vmul.f32 %v1535, %v1541
        %v1546 = vmul.f32 %v1537, %v1542
        %v1547 = vadd.f32 %v1521, %v1543
        %v1548 = vadd.f32 %v1522, %v1544
        %v1549 = vadd.f32 %v1523, %v1545
        %v1550 = vadd.f32 %v1524, %v1546
        %1551 = vrot.lane.b32.xlu0 %v459, 83
        %v1552 = vpop.permute.xlu0 %1551
        %1553 = vrot.lane.b32.xlu0 %v461, 83
        %v1554 = vpop.permute.xlu0 %1553
        %1555 = vrot.lane.b32.xlu0 %v460, 83
        %v1556 = vpop.permute.xlu0 %1555
        %1557 = vrot.lane.b32.xlu0 %v462, 83
        %v1558 = vpop.permute.xlu0 %1557
        %vm1559 = vcmp.lt.s32.totalorder %v484, 83
        %v1560 = vsel %vm1559, %v1552, %v1556
        %v1561 = vsel %vm1559, %v1554, %v1558
        %v1562 = vsel %vm1559, %v1556, %v1552
        %v1563 = vsel %vm1559, %v1558, %v1554
        %s1564 = scalar_lea.vmem [#allocation4], 1344
        %v1565 = vld [vmem:[%s1564] sm:$0xff]
        %v1566 = vld [vmem:[%s1564 + $0x8] sm:$0xff]
        %v1567 = vld [vmem:[%s1564 + $0x10] sm:$0xff]
        %v1568 = vld [vmem:[%s1564 + $0x18] sm:$0xff]
        %v1569 = vmul.f32 %v1560, %v1565
        %v1570 = vmul.f32 %v1562, %v1566
        %v1571 = vmul.f32 %v1561, %v1567
        %v1572 = vmul.f32 %v1563, %v1568
        %v1573 = vadd.f32 %v1547, %v1569
        %v1574 = vadd.f32 %v1548, %v1570
        %v1575 = vadd.f32 %v1549, %v1571
        %v1576 = vadd.f32 %v1550, %v1572
        %1577 = vrot.lane.b32.xlu0 %v459, 82
        %v1578 = vpop.permute.xlu0 %1577
        %1579 = vrot.lane.b32.xlu0 %v461, 82
        %v1580 = vpop.permute.xlu0 %1579
        %1581 = vrot.lane.b32.xlu0 %v460, 82
        %v1582 = vpop.permute.xlu0 %1581
        %1583 = vrot.lane.b32.xlu0 %v462, 82
        %v1584 = vpop.permute.xlu0 %1583
        %vm1585 = vcmp.lt.s32.totalorder %v484, 82
        %v1586 = vsel %vm1585, %v1578, %v1582
        %v1587 = vsel %vm1585, %v1580, %v1584
        %v1588 = vsel %vm1585, %v1582, %v1578
        %v1589 = vsel %vm1585, %v1584, %v1580
        %s1590 = scalar_lea.vmem [#allocation4], 1376
        %v1591 = vld [vmem:[%s1590] sm:$0xff]
        %v1592 = vld [vmem:[%s1590 + $0x8] sm:$0xff]
        %v1593 = vld [vmem:[%s1590 + $0x10] sm:$0xff]
        %v1594 = vld [vmem:[%s1590 + $0x18] sm:$0xff]
        %v1595 = vmul.f32 %v1586, %v1591
        %v1596 = vmul.f32 %v1588, %v1592
        %v1597 = vmul.f32 %v1587, %v1593
        %v1598 = vmul.f32 %v1589, %v1594
        %v1599 = vadd.f32 %v1573, %v1595
        %v1600 = vadd.f32 %v1574, %v1596
        %v1601 = vadd.f32 %v1575, %v1597
        %v1602 = vadd.f32 %v1576, %v1598
        %1603 = vrot.lane.b32.xlu0 %v459, 81
        %v1604 = vpop.permute.xlu0 %1603
        %1605 = vrot.lane.b32.xlu0 %v461, 81
        %v1606 = vpop.permute.xlu0 %1605
        %1607 = vrot.lane.b32.xlu0 %v460, 81
        %v1608 = vpop.permute.xlu0 %1607
        %1609 = vrot.lane.b32.xlu0 %v462, 81
        %v1610 = vpop.permute.xlu0 %1609
        %vm1611 = vcmp.lt.s32.totalorder %v484, 81
        %v1612 = vsel %vm1611, %v1604, %v1608
        %v1613 = vsel %vm1611, %v1606, %v1610
        %v1614 = vsel %vm1611, %v1608, %v1604
        %v1615 = vsel %vm1611, %v1610, %v1606
        %s1616 = scalar_lea.vmem [#allocation4], 1408
        %v1617 = vld [vmem:[%s1616] sm:$0xff]
        %v1618 = vld [vmem:[%s1616 + $0x8] sm:$0xff]
        %v1619 = vld [vmem:[%s1616 + $0x10] sm:$0xff]
        %v1620 = vld [vmem:[%s1616 + $0x18] sm:$0xff]
        %v1621 = vmul.f32 %v1612, %v1617
        %v1622 = vmul.f32 %v1614, %v1618
        %v1623 = vmul.f32 %v1613, %v1619
        %v1624 = vmul.f32 %v1615, %v1620
        %v1625 = vadd.f32 %v1599, %v1621
        %v1626 = vadd.f32 %v1600, %v1622
        %v1627 = vadd.f32 %v1601, %v1623
        %v1628 = vadd.f32 %v1602, %v1624
        %1629 = vrot.lane.b32.xlu0 %v459, 80
        %v1630 = vpop.permute.xlu0 %1629
        %1631 = vrot.lane.b32.xlu0 %v461, 80
        %v1632 = vpop.permute.xlu0 %1631
        %1633 = vrot.lane.b32.xlu0 %v460, 80
        %v1634 = vpop.permute.xlu0 %1633
        %1635 = vrot.lane.b32.xlu0 %v462, 80
        %v1636 = vpop.permute.xlu0 %1635
        %vm1637 = vcmp.lt.s32.totalorder %v484, 80
        %v1638 = vsel %vm1637, %v1630, %v1634
        %v1639 = vsel %vm1637, %v1632, %v1636
        %v1640 = vsel %vm1637, %v1634, %v1630
        %v1641 = vsel %vm1637, %v1636, %v1632
        %s1642 = scalar_lea.vmem [#allocation4], 1440
        %v1643 = vld [vmem:[%s1642] sm:$0xff]
        %v1644 = vld [vmem:[%s1642 + $0x8] sm:$0xff]
        %v1645 = vld [vmem:[%s1642 + $0x10] sm:$0xff]
        %v1646 = vld [vmem:[%s1642 + $0x18] sm:$0xff]
        %v1647 = vmul.f32 %v1638, %v1643
        %v1648 = vmul.f32 %v1640, %v1644
        %v1649 = vmul.f32 %v1639, %v1645
        %v1650 = vmul.f32 %v1641, %v1646
        %v1651 = vadd.f32 %v1625, %v1647
        %v1652 = vadd.f32 %v1626, %v1648
        %v1653 = vadd.f32 %v1627, %v1649
        %v1654 = vadd.f32 %v1628, %v1650
        %1655 = vrot.lane.b32.xlu0 %v459, 79
        %v1656 = vpop.permute.xlu0 %1655
        %1657 = vrot.lane.b32.xlu0 %v461, 79
        %v1658 = vpop.permute.xlu0 %1657
        %1659 = vrot.lane.b32.xlu0 %v460, 79
        %v1660 = vpop.permute.xlu0 %1659
        %1661 = vrot.lane.b32.xlu0 %v462, 79
        %v1662 = vpop.permute.xlu0 %1661
        %vm1663 = vcmp.lt.s32.totalorder %v484, 79
        %v1664 = vsel %vm1663, %v1656, %v1660
        %v1665 = vsel %vm1663, %v1658, %v1662
        %v1666 = vsel %vm1663, %v1660, %v1656
        %v1667 = vsel %vm1663, %v1662, %v1658
        %s1668 = scalar_lea.vmem [#allocation4], 1472
        %v1669 = vld [vmem:[%s1668] sm:$0xff]
        %v1670 = vld [vmem:[%s1668 + $0x8] sm:$0xff]
        %v1671 = vld [vmem:[%s1668 + $0x10] sm:$0xff]
        %v1672 = vld [vmem:[%s1668 + $0x18] sm:$0xff]
        %v1673 = vmul.f32 %v1664, %v1669
        %v1674 = vmul.f32 %v1666, %v1670
        %v1675 = vmul.f32 %v1665, %v1671
        %v1676 = vmul.f32 %v1667, %v1672
        %v1677 = vadd.f32 %v1651, %v1673
        %v1678 = vadd.f32 %v1652, %v1674
        %v1679 = vadd.f32 %v1653, %v1675
        %v1680 = vadd.f32 %v1654, %v1676
        %1681 = vrot.lane.b32.xlu0 %v459, 78
        %v1682 = vpop.permute.xlu0 %1681
        %1683 = vrot.lane.b32.xlu0 %v461, 78
        %v1684 = vpop.permute.xlu0 %1683
        %1685 = vrot.lane.b32.xlu0 %v460, 78
        %v1686 = vpop.permute.xlu0 %1685
        %1687 = vrot.lane.b32.xlu0 %v462, 78
        %v1688 = vpop.permute.xlu0 %1687
        %vm1689 = vcmp.lt.s32.totalorder %v484, 78
        %v1690 = vsel %vm1689, %v1682, %v1686
        %v1691 = vsel %vm1689, %v1684, %v1688
        %v1692 = vsel %vm1689, %v1686, %v1682
        %v1693 = vsel %vm1689, %v1688, %v1684
        %s1694 = scalar_lea.vmem [#allocation4], 1504
        %v1695 = vld [vmem:[%s1694] sm:$0xff]
        %v1696 = vld [vmem:[%s1694 + $0x8] sm:$0xff]
        %v1697 = vld [vmem:[%s1694 + $0x10] sm:$0xff]
        %v1698 = vld [vmem:[%s1694 + $0x18] sm:$0xff]
        %v1699 = vmul.f32 %v1690, %v1695
        %v1700 = vmul.f32 %v1692, %v1696
        %v1701 = vmul.f32 %v1691, %v1697
        %v1702 = vmul.f32 %v1693, %v1698
        %v1703 = vadd.f32 %v1677, %v1699
        %v1704 = vadd.f32 %v1678, %v1700
        %v1705 = vadd.f32 %v1679, %v1701
        %v1706 = vadd.f32 %v1680, %v1702
        %1707 = vrot.lane.b32.xlu0 %v459, 77
        %v1708 = vpop.permute.xlu0 %1707
        %1709 = vrot.lane.b32.xlu0 %v461, 77
        %v1710 = vpop.permute.xlu0 %1709
        %1711 = vrot.lane.b32.xlu0 %v460, 77
        %v1712 = vpop.permute.xlu0 %1711
        %1713 = vrot.lane.b32.xlu0 %v462, 77
        %v1714 = vpop.permute.xlu0 %1713
        %vm1715 = vcmp.lt.s32.totalorder %v484, 77
        %v1716 = vsel %vm1715, %v1708, %v1712
        %v1717 = vsel %vm1715, %v1710, %v1714
        %v1718 = vsel %vm1715, %v1712, %v1708
        %v1719 = vsel %vm1715, %v1714, %v1710
        %s1720 = scalar_lea.vmem [#allocation4], 1536
        %v1721 = vld [vmem:[%s1720] sm:$0xff]
        %v1722 = vld [vmem:[%s1720 + $0x8] sm:$0xff]
        %v1723 = vld [vmem:[%s1720 + $0x10] sm:$0xff]
        %v1724 = vld [vmem:[%s1720 + $0x18] sm:$0xff]
        %v1725 = vmul.f32 %v1716, %v1721
        %v1726 = vmul.f32 %v1718, %v1722
        %v1727 = vmul.f32 %v1717, %v1723
        %v1728 = vmul.f32 %v1719, %v1724
        %v1729 = vadd.f32 %v1703, %v1725
        %v1730 = vadd.f32 %v1704, %v1726
        %v1731 = vadd.f32 %v1705, %v1727
        %v1732 = vadd.f32 %v1706, %v1728
        %1734 = vset.pattern.permute.xlu0 0
        %1735 = vperm.xlu0 %1734, %v340
        %v1736 = vpop.permute.xlu0 %1735
        %vm1738 = vcmask 130048
        %v1740 = vsel %vm1738, %v339, 0
        %1742 = vmatprep.subr.mxu0 %v1730
        %1743 = vmatpush1.msra.mxu0 %v1729
        %1744 = vmatprep.subr.mxu0 %v1732
        %1745 = vmatpush1.msra.mxu0 %v1731
        %1746 = vmatprep.subr.mxu0 0.0
        %1747 = vmatpush1.msra.mxu0 0.0
        %1748 = vmatprep.subr.mxu0 0.0
        %1749 = vmatpush1.msra.mxu0 0.0
        %1750 = vmatprep.subr.mxu0 0.0
        %1751 = vmatpush1.msra.mxu0 0.0
        %1752 = vmatprep.subr.mxu0 0.0
        %1753 = vmatpush1.msra.mxu0 0.0
        %1754 = vmatprep.subr.mxu0 0.0
        %1755 = vmatpush1.msra.mxu0 0.0
        %1756 = vmatprep.subr.mxu0 0.0
        %1757 = vmatpush1.msra.mxu0 0.0
        %1758 = vmatprep.subr.mxu0 0.0
        %1759 = vmatpush1.msra.mxu0 0.0
        %1760 = vmatprep.subr.mxu0 0.0
        %1761 = vmatpush1.msra.mxu0 0.0
        %1762 = vmatprep.subr.mxu0 0.0
        %1763 = vmatpush1.msra.mxu0 0.0
        %1764 = vmatprep.subr.mxu0 0.0
        %1765 = vmatpush1.msra.mxu0 0.0
        %1766 = vmatprep.subr.mxu0 0.0
        %1767 = vmatpush1.msra.mxu0 0.0
        %1768 = vmatprep.subr.mxu0 0.0
        %1769 = vmatpush1.msra.mxu0 0.0
        %1770 = vmatprep.subr.mxu0 0.0
        %1771 = vmatpush1.msra.mxu0 0.0
        %1772 = vmatprep.subr.mxu0 0.0
        %1773 = vmatpush1.msra.mxu0 0.0
        %1774 = vmatprep.subr.mxu0 0.0
        %1775 = vmatpush1.msra.mxu0 0.0
        %1776 = vmatprep.subr.mxu0 0.0
        %1777 = vmatpush1.msra.mxu0 0.0
        %1778 = vmatprep.subr.mxu0 0.0
        %1779 = vmatpush1.msra.mxu0 0.0
        %1780 = vmatprep.subr.mxu0 0.0
        %1781 = vmatpush1.msra.mxu0 0.0
        %1782 = vmatprep.subr.mxu0 0.0
        %1783 = vmatpush1.msra.mxu0 0.0
        %1784 = vmatprep.subr.mxu0 0.0
        %1785 = vmatpush1.msra.mxu0 0.0
        %1786 = vmatprep.subr.mxu0 0.0
        %1787 = vmatpush1.msra.mxu0 0.0
        %1788 = vmatprep.subr.mxu0 0.0
        %1789 = vmatpush1.msra.mxu0 0.0
        %1790 = vmatprep.subr.mxu0 0.0
        %1791 = vmatpush1.msra.mxu0 0.0
        %1792 = vmatprep.subr.mxu0 0.0
        %1793 = vmatpush1.msra.mxu0 0.0
        %1794 = vmatprep.subr.mxu0 0.0
        %1795 = vmatpush1.msra.mxu0 0.0
        %1796 = vmatprep.subr.mxu0 0.0
        %1797 = vmatpush1.msra.mxu0 0.0
        %1798 = vmatprep.subr.mxu0 0.0
        %1799 = vmatpush1.msra.mxu0 0.0
        %1800 = vmatprep.subr.mxu0 0.0
        %1801 = vmatpush1.msra.mxu0 0.0
        %1802 = vmatprep.subr.mxu0 0.0
        %1803 = vmatpush1.msra.mxu0 0.0
        %1804 = vmatprep.subr.mxu0 0.0
        %1805 = vmatpush1.msra.mxu0 0.0
        %1806 = vmatprep.mubr.f32.mxu0 0.0
        %1807 = vmatmul.mubr.f32.gmra.mrb[0].mxu0 %v1740
        %v1808 = vpop.f32.mrb[0].mxu0
        %v1809 = vadd.f32 %v1736, %v1808
        %v1810 = vpop.f32.mrb[0].mxu0
        %v1811 = vadd.f32 %v1736, %v1810
        %1812 = vdwg.mxu0
        %1813 = vst [vmem:[%s302] sm:$0xff] %v1809
        %1814 = vst [vmem:[%s302 + $0x8] sm:$0xff] %v1811
        %p1815 = scmp.lt.s32.totalorder %s23, 3
        %s1816 = scalar_select %p1815, %s23, 3
        %p1817 = scmp.lt.s32.totalorder %s22, 1
        %s1818 = scalar_select %p1817, %s22, 1
        %s1819 = smul.addr %s1818, 2
        %s1820 = smul.addr %s1816, 4
        %s1821 = sadd.s32 %s1819, %s1820
        %s1822 = smul.addr %s1821, 8
        %s1823 = scalar_lea.vmem %s6, %s1822
        // Predicated region
        $region53: #{sepconv_forward.1} parent=43 // pred_check
          %p1824 = pneg %p183
        $region54: #{sepconv_forward.1} parent=43 // pred_check_branch
          %1826 = sbr.rel (%p1824) target = $region56
        $region55: #{sepconv_forward.1} parent=43 // pred_region
          _
        $region56: #{sepconv_forward.1} parent=43 // pred_fallthru
          _
      $region44: #{sepconv_forward.1} parent=5 // pred_fallthru
        _
      %p1827 = scmp.le.s32.totalorder 2, %s13
      // Predicated region
      $region57: #{sepconv_forward.1} parent=5 // pred_check
        %p1828 = pneg %p1827
      $region58: #{sepconv_forward.1} parent=5 // pred_check_branch
        %1830 = sbr.rel (%p1828) target = $region60
      $region59: #{sepconv_forward.1} parent=5 // pred_region
        %s1831 = ssub.s32 %s13, 2
        // Predicated region
        $region61: #{sepconv_forward.1} parent=59 // pred_check
          %p1832 = pneg %p189
        $region62: #{sepconv_forward.1} parent=59 // pred_check_branch
          %1834 = sbr.rel (%p1832) target = $region64
        $region63: #{sepconv_forward.1} parent=59 // pred_region
          %p1835 = scmp.lt.s32.totalorder %s25, 3
          %s1836 = scalar_select %p1835, %s25, 3
          %p1837 = scmp.lt.s32.totalorder %s24, 1
          %s1838 = scalar_select %p1837, %s24, 1
          %s1839 = smul.addr %s1838, 2
          %s1840 = smul.addr %s1836, 4
          %s1841 = sadd.s32 %s1839, %s1840
          %s1842 = smul.addr %s1841, 8
          %s1843 = scalar_lea.vmem %s6, %s1842
        $region64: #{sepconv_forward.1} parent=59 // pred_fallthru
          _
      $region60: #{sepconv_forward.1} parent=5 // pred_fallthru
        _
    $region6: #{sepconv_forward.1} parent=1 // loop_footer
      %s17 = sadd.s32 1, %s13
    $region7: #{sepconv_forward.1} parent=1 // loop_footer_branch
      %12 = sbr.rel target = $region3
    $region8: #{sepconv_forward.1} parent=1 // loop_exit
      _
    %1844 = vsyncpa [#allocation5], 1
    %s1845 = scalar_lea.sflag [#allocation5], 1
    %1846 = vsyncpa %s1845, 1

</llo_original>
